<compile_context>
chip_gen: v7x
topology: tpu7x:2x2x1
jax: 0.10.0
libtpu: 0.0.40
codegen_flags: <defaults>
</compile_context>

<pallas_src>
import jax
import jax.numpy as jnp
from jax.experimental import pallas as pl
from jax.experimental.pallas import tpu as pltpu

# ---- problem sizes (lane/sublane aligned, still small) -----------------------
B      = 256          # batch
TB     = 128          # batch tile -> grid of 2 ("parallel": one tile per TC on v7x)
D_IN   = 256          # encoder.n_input
HIDDEN = 128          # encoder.n_hidden
N_Z    = 64           # decoder.n_z
D_HEAD = 2 * N_Z      # fused mu|logvar head width (lane-dense 128)


def _vae_kernel(x_ref, eps_ref,
                w_enc_ref, b_enc_ref,
                w_head_ref, b_head_ref,
                w_d1_ref, b_d1_ref,
                w_d2_ref, b_d2_ref,
                res_ref, z_ref, head_ref):
    """One batch tile of the VAE forward; weights stay resident across the grid."""
    x = x_ref[...]                                                  # bf16 [TB, D_IN]

    # Encoder: Linear + ReLU (bf16 MXU operands, f32 accumulate / elementwise).
    h = jnp.dot(x, w_enc_ref[...], preferred_element_type=jnp.float32)
    h = jnp.maximum(h + b_enc_ref[...], 0.0)                        # f32 [TB, HIDDEN]

    # Fused mu|logvar head: one lane-dense [HIDDEN, 2*N_Z] matmul.
    head = jnp.dot(h.astype(jnp.bfloat16), w_head_ref[...],
                   preferred_element_type=jnp.float32) + b_head_ref[...]
    mu = head[:, :N_Z]
    logvar = head[:, N_Z:]

    # Reparametrize: z = eps * exp(0.5*logvar) + mu  (eps supplied by wrapper).
    z = eps_ref[...] * jnp.exp(0.5 * logvar) + mu                   # f32 [TB, N_Z]

    # Decoder: Linear + ReLU + Linear.
    d = jnp.dot(z.astype(jnp.bfloat16), w_d1_ref[...],
                preferred_element_type=jnp.float32)
    d = jnp.maximum(d + b_d1_ref[...], 0.0)
    res = jnp.dot(d.astype(jnp.bfloat16), w_d2_ref[...],
                  preferred_element_type=jnp.float32) + b_d2_ref[...]

    res_ref[...] = res.astype(res_ref.dtype)                        # bf16 writeback
    z_ref[...] = z.astype(z_ref.dtype)
    head_ref[...] = head.astype(head_ref.dtype)


@jax.jit
def vae_forward(x_bf16, eps, params):
    """(res, z, mu, logvar) = VAE forward.  Single pallas_call with a 2-step
    parallel batch grid; weight BlockSpecs use constant index_maps so the
    weights are fetched to VMEM only once."""
    (w_enc, b_enc, w_head, b_head, w_d1, b_d1, w_d2, b_d2) = params
    batch = x_bf16.shape[0]
    assert batch % TB == 0
    grid = (batch // TB,)

    row = lambda i: (i, 0)     # per-tile blocks (x / eps / outputs)
    const = lambda i: (0, 0)   # weights: same block every step -> VMEM-resident

    in_specs = [
        pl.BlockSpec((TB, D_IN), row),          # x (bf16)
        pl.BlockSpec((TB, N_Z), row),           # eps (f32)
        pl.BlockSpec((D_IN, HIDDEN), const),    # w_enc (bf16)
        pl.BlockSpec((1, HIDDEN), const),       # b_enc (f32)
        pl.BlockSpec((HIDDEN, D_HEAD), const),  # w_head = [w_mu | w_logvar] (bf16)
        pl.BlockSpec((1, D_HEAD), const),       # b_head (f32)
        pl.BlockSpec((N_Z, HIDDEN), const),     # w_d1 (bf16)
        pl.BlockSpec((1, HIDDEN), const),       # b_d1 (f32)
        pl.BlockSpec((HIDDEN, D_IN), const),    # w_d2 (bf16)
        pl.BlockSpec((1, D_IN), const),         # b_d2 (f32)
    ]
    out_specs = (
        pl.BlockSpec((TB, D_IN), row),          # res (bf16)
        pl.BlockSpec((TB, N_Z), row),           # z (f32)
        pl.BlockSpec((TB, D_HEAD), row),        # mu | logvar packed (f32, lane-dense)
    )
    out_shapes = (
        jax.ShapeDtypeStruct((batch, D_IN), jnp.bfloat16),
        jax.ShapeDtypeStruct((batch, N_Z), jnp.float32),
        jax.ShapeDtypeStruct((batch, D_HEAD), jnp.float32),
    )

    flops = 2 * batch * (D_IN * HIDDEN + HIDDEN * D_HEAD
                         + N_Z * HIDDEN + HIDDEN * D_IN)
    bytes_accessed = (
        batch * D_IN * 2                                                  # x (bf16)
        + batch * N_Z * 4                                                 # eps (f32)
        + 2 * (D_IN * HIDDEN + HIDDEN * D_HEAD
               + N_Z * HIDDEN + HIDDEN * D_IN)                            # bf16 weights
        + 4 * (HIDDEN + D_HEAD + HIDDEN + D_IN)                           # f32 biases
        + batch * D_IN * 2                                                # res (bf16)
        + batch * N_Z * 4                                                 # z (f32)
        + batch * D_HEAD * 4                                              # head (f32)
    )
    cost = pl.CostEstimate(flops=flops,
                           transcendentals=batch * N_Z,
                           bytes_accessed=bytes_accessed)

    res, z, head = pl.pallas_call(
        _vae_kernel,
        out_shape=out_shapes,
        grid=grid,
        in_specs=in_specs,
        out_specs=out_specs,
        compiler_params=pltpu.CompilerParams(
            dimension_semantics=("parallel",)),   # one tile per TC on v7x
        cost_estimate=cost,
    )(x_bf16, eps, w_enc, b_enc, w_head, b_head, w_d1, b_d1, w_d2, b_d2)

    mu = head[:, :N_Z]
    logvar = head[:, N_Z:]
    return res, z, mu, logvar


def init_params(key):
    """Deterministic parameter init (PyTorch default nn.Linear init), then
    fuse the mu/logvar heads for the lane-dense layout."""
    ks = jax.random.split(key, 10)

    def linear(kw, kb, fan_in, fan_out):
        bound = 1.0 / jnp.sqrt(jnp.float32(fan_in))
        w = jax.random.uniform(kw, (fan_in, fan_out), jnp.float32, -bound, bound)
        b = jax.random.uniform(kb, (1, fan_out), jnp.float32, -bound, bound)
        return w, b

    w_enc, b_enc = linear(ks[0], ks[1], D_IN, HIDDEN)
    w_mu, b_mu = linear(ks[2], ks[3], HIDDEN, N_Z)
    w_lv, b_lv = linear(ks[4], ks[5], HIDDEN, N_Z)
    w_d1, b_d1 = linear(ks[6], ks[7], N_Z, HIDDEN)
    w_d2, b_d2 = linear(ks[8], ks[9], HIDDEN, D_IN)

    w_head = jnp.concatenate([w_mu, w_lv], axis=1)                  # [HIDDEN, 2*N_Z]
    b_head = jnp.concatenate([b_mu, b_lv], axis=1)                  # [1, 2*N_Z]

    bf16 = lambda a: a.astype(jnp.bfloat16)
    return (bf16(w_enc), b_enc,
            bf16(w_head), b_head,
            bf16(w_d1), b_d1,
            bf16(w_d2), b_d2)


# ---- pure-JAX references mirroring the kernel's bf16/f32 math ---------------
def reference_encode(x_bf16, params):
    w_enc, b_enc, w_head, b_head = params[:4]
    h = jnp.maximum(
        jnp.dot(x_bf16, w_enc, preferred_element_type=jnp.float32) + b_enc, 0.0)
    head = jnp.dot(h.astype(jnp.bfloat16), w_head,
                   preferred_element_type=jnp.float32) + b_head
    return head[:, :N_Z], head[:, N_Z:]


def reference_decode(z, params):
    w_d1, b_d1, w_d2, b_d2 = params[4:]
    d = jnp.maximum(
        jnp.dot(z.astype(jnp.bfloat16), w_d1,
                preferred_element_type=jnp.float32) + b_d1, 0.0)
    return jnp.dot(d.astype(jnp.bfloat16), w_d2,
                   preferred_element_type=jnp.float32) + b_d2


if __name__ == "__main__":
    key = jax.random.PRNGKey(0)
    k_x, k_params, k_eps = jax.random.split(key, 3)

    x = jax.random.normal(k_x, (B, D_IN), jnp.float32).astype(jnp.bfloat16)
    params = init_params(k_params)
    # Fresh standard-normal noise per forward call (PyTorch samples eps inside
    # forward(); here it is sampled in the wrapper and fed to the kernel).
    eps = jax.random.normal(k_eps, (B, N_Z), jnp.float32)

    res, z, mu, logvar = vae_forward(x, eps, params)
    jax.block_until_ready((res, z, mu, logvar))

    # mu / logvar against a pure-JAX encoder using the identical bf16 weights.
    r_mu, r_lv = reference_encode(x, params)
    assert jnp.allclose(mu, r_mu, atol=1e-2, rtol=1e-2)
    assert jnp.allclose(logvar, r_lv, atol=1e-2, rtol=1e-2)

    # Reparametrization check with the same eps.
    r_z = eps * jnp.exp(0.5 * r_lv) + r_mu
    assert jnp.allclose(z, r_z, atol=1e-2, rtol=1e-2)

    # Decoder output (bf16) against the pure-JAX decoder applied to the kernel's z.
    r_res = reference_decode(z, params)
    assert jnp.allclose(res.astype(jnp.float32), r_res, atol=3e-2, rtol=3e-2)

    assert jnp.all(jnp.isfinite(z)) and jnp.all(jnp.isfinite(res.astype(jnp.float32)))

    print("KERNEL_OK")
</pallas_src>

<mosaic_0001>
module attributes {stable_mosaic.version = 11 : i64} {
  func.func @_vae_kernel(%arg0: i32, %arg1: memref<128x256xbf16, #tpu.memory_space<vmem>>, %arg2: memref<128x64xf32, #tpu.memory_space<vmem>>, %arg3: memref<256x128xbf16, #tpu.memory_space<vmem>>, %arg4: memref<1x128xf32, #tpu.memory_space<vmem>>, %arg5: memref<128x128xbf16, #tpu.memory_space<vmem>>, %arg6: memref<1x128xf32, #tpu.memory_space<vmem>>, %arg7: memref<64x128xbf16, #tpu.memory_space<vmem>>, %arg8: memref<1x128xf32, #tpu.memory_space<vmem>>, %arg9: memref<128x256xbf16, #tpu.memory_space<vmem>>, %arg10: memref<1x256xf32, #tpu.memory_space<vmem>>, %arg11: memref<128x256xbf16, #tpu.memory_space<vmem>>, %arg12: memref<128x64xf32, #tpu.memory_space<vmem>>, %arg13: memref<128x128xf32, #tpu.memory_space<vmem>>) attributes {dimension_semantics = [#tpu.dimension_semantics<parallel>], iteration_bounds = array<i64: 2>, scalar_prefetch = 0 : i64, scratch_operands = 0 : i64, tpu.core_type = #tpu.core_type<tc>, window_params = [{transform_indices = @transform_0, window_bounds = array<i64: 128, 256>}, {transform_indices = @transform_1, window_bounds = array<i64: 128, 64>}, {pipeline_mode = #tpu.pipeline_mode<synchronous>, transform_indices = @transform_2, window_bounds = array<i64: 256, 128>}, {pipeline_mode = #tpu.pipeline_mode<synchronous>, transform_indices = @transform_3, window_bounds = array<i64: 1, 128>}, {pipeline_mode = #tpu.pipeline_mode<synchronous>, transform_indices = @transform_4, window_bounds = array<i64: 128, 128>}, {pipeline_mode = #tpu.pipeline_mode<synchronous>, transform_indices = @transform_5, window_bounds = array<i64: 1, 128>}, {pipeline_mode = #tpu.pipeline_mode<synchronous>, transform_indices = @transform_6, window_bounds = array<i64: 64, 128>}, {pipeline_mode = #tpu.pipeline_mode<synchronous>, transform_indices = @transform_7, window_bounds = array<i64: 1, 128>}, {pipeline_mode = #tpu.pipeline_mode<synchronous>, transform_indices = @transform_8, window_bounds = array<i64: 128, 256>}, {pipeline_mode = #tpu.pipeline_mode<synchronous>, transform_indices = @transform_9, window_bounds = array<i64: 1, 256>}, {transform_indices = @transform_10, window_bounds = array<i64: 128, 256>}, {transform_indices = @transform_11, window_bounds = array<i64: 128, 64>}, {transform_indices = @transform_12, window_bounds = array<i64: 128, 128>}]} {
    %c0 = arith.constant 0 : index
    %c0_0 = arith.constant 0 : index
    %0 = vector.load %arg1[%c0, %c0_0] : memref<128x256xbf16, #tpu.memory_space<vmem>>, vector<128x256xbf16>
    %c0_1 = arith.constant 0 : index
    %c0_2 = arith.constant 0 : index
    %1 = vector.load %arg3[%c0_1, %c0_2] : memref<256x128xbf16, #tpu.memory_space<vmem>>, vector<256x128xbf16>
    %cst = arith.constant dense<0.000000e+00> : vector<128x128xf32>
    %2 = tpu.matmul %0, %1, %cst {dimension_numbers = #tpu.dot_dimension_numbers<[1], [0], [0], [1], [0, 0, 1, 1], [], []>} : vector<128x256xbf16>, vector<256x128xbf16>, vector<128x128xf32> -> vector<128x128xf32>
    %c0_3 = arith.constant 0 : index
    %c0_4 = arith.constant 0 : index
    %3 = vector.load %arg4[%c0_3, %c0_4] : memref<1x128xf32, #tpu.memory_space<vmem>>, vector<1x128xf32>
    %4 = vector.broadcast %3 : vector<1x128xf32> to vector<128x128xf32>
    %5 = arith.addf %2, %4 : vector<128x128xf32>
    %cst_5 = arith.constant 0.000000e+00 : f32
    %6 = vector.broadcast %cst_5 : f32 to vector<128x128xf32>
    %7 = arith.maximumf %5, %6 : vector<128x128xf32>
    %8 = arith.truncf %7 : vector<128x128xf32> to vector<128x128xbf16>
    %c0_6 = arith.constant 0 : index
    %c0_7 = arith.constant 0 : index
    %9 = vector.load %arg5[%c0_6, %c0_7] : memref<128x128xbf16, #tpu.memory_space<vmem>>, vector<128x128xbf16>
    %cst_8 = arith.constant dense<0.000000e+00> : vector<128x128xf32>
    %10 = tpu.matmul %8, %9, %cst_8 {dimension_numbers = #tpu.dot_dimension_numbers<[1], [0], [0], [1], [0, 0, 1, 1], [], []>} : vector<128x128xbf16>, vector<128x128xbf16>, vector<128x128xf32> -> vector<128x128xf32>
    %c0_9 = arith.constant 0 : index
    %c0_10 = arith.constant 0 : index
    %11 = vector.load %arg6[%c0_9, %c0_10] : memref<1x128xf32, #tpu.memory_space<vmem>>, vector<1x128xf32>
    %12 = vector.broadcast %11 : vector<1x128xf32> to vector<128x128xf32>
    %13 = arith.addf %10, %12 : vector<128x128xf32>
    %14 = vector.extract_strided_slice %13 {offsets = [0, 0], sizes = [128, 64], strides = [1, 1]} : vector<128x128xf32> to vector<128x64xf32>
    %15 = vector.extract_strided_slice %13 {offsets = [0, 64], sizes = [128, 64], strides = [1, 1]} : vector<128x128xf32> to vector<128x64xf32>
    %c0_11 = arith.constant 0 : index
    %c0_12 = arith.constant 0 : index
    %16 = vector.load %arg2[%c0_11, %c0_12] : memref<128x64xf32, #tpu.memory_space<vmem>>, vector<128x64xf32>
    %cst_13 = arith.constant 5.000000e-01 : f32
    %17 = vector.broadcast %cst_13 : f32 to vector<128x64xf32>
    %18 = arith.mulf %17, %15 : vector<128x64xf32>
    %19 = math.exp %18 : vector<128x64xf32>
    %20 = arith.mulf %16, %19 : vector<128x64xf32>
    %21 = arith.addf %20, %14 : vector<128x64xf32>
    %22 = arith.truncf %21 : vector<128x64xf32> to vector<128x64xbf16>
    %c0_14 = arith.constant 0 : index
    %c0_15 = arith.constant 0 : index
    %23 = vector.load %arg7[%c0_14, %c0_15] : memref<64x128xbf16, #tpu.memory_space<vmem>>, vector<64x128xbf16>
    %cst_16 = arith.constant dense<0.000000e+00> : vector<128x128xf32>
    %24 = tpu.matmul %22, %23, %cst_16 {dimension_numbers = #tpu.dot_dimension_numbers<[1], [0], [0], [1], [0, 0, 1, 1], [], []>} : vector<128x64xbf16>, vector<64x128xbf16>, vector<128x128xf32> -> vector<128x128xf32>
    %c0_17 = arith.constant 0 : index
    %c0_18 = arith.constant 0 : index
    %25 = vector.load %arg8[%c0_17, %c0_18] : memref<1x128xf32, #tpu.memory_space<vmem>>, vector<1x128xf32>
    %26 = vector.broadcast %25 : vector<1x128xf32> to vector<128x128xf32>
    %27 = arith.addf %24, %26 : vector<128x128xf32>
    %cst_19 = arith.constant 0.000000e+00 : f32
    %28 = vector.broadcast %cst_19 : f32 to vector<128x128xf32>
    %29 = arith.maximumf %27, %28 : vector<128x128xf32>
    %30 = arith.truncf %29 : vector<128x128xf32> to vector<128x128xbf16>
    %c0_20 = arith.constant 0 : index
    %c0_21 = arith.constant 0 : index
    %31 = vector.load %arg9[%c0_20, %c0_21] : memref<128x256xbf16, #tpu.memory_space<vmem>>, vector<128x256xbf16>
    %cst_22 = arith.constant dense<0.000000e+00> : vector<128x256xf32>
    %32 = tpu.matmul %30, %31, %cst_22 {dimension_numbers = #tpu.dot_dimension_numbers<[1], [0], [0], [1], [0, 0, 1, 1], [], []>} : vector<128x128xbf16>, vector<128x256xbf16>, vector<128x256xf32> -> vector<128x256xf32>
    %c0_23 = arith.constant 0 : index
    %c0_24 = arith.constant 0 : index
    %33 = vector.load %arg10[%c0_23, %c0_24] : memref<1x256xf32, #tpu.memory_space<vmem>>, vector<1x256xf32>
    %34 = vector.broadcast %33 : vector<1x256xf32> to vector<128x256xf32>
    %35 = arith.addf %32, %34 : vector<128x256xf32>
    %36 = arith.truncf %35 : vector<128x256xf32> to vector<128x256xbf16>
    %c0_25 = arith.constant 0 : index
    %c0_26 = arith.constant 0 : index
    %37 = vector.load %arg11[%c0_25, %c0_26] : memref<128x256xbf16, #tpu.memory_space<vmem>>, vector<128x256xbf16>
    tpu.vector_store %arg11[%c0_25, %c0_26], %36 {strides = array<i32>} : memref<128x256xbf16, #tpu.memory_space<vmem>>, vector<128x256xbf16>,
    %c0_27 = arith.constant 0 : index
    %c0_28 = arith.constant 0 : index
    %38 = vector.load %arg12[%c0_27, %c0_28] : memref<128x64xf32, #tpu.memory_space<vmem>>, vector<128x64xf32>
    tpu.vector_store %arg12[%c0_27, %c0_28], %21 {strides = array<i32>} : memref<128x64xf32, #tpu.memory_space<vmem>>, vector<128x64xf32>,
    %c0_29 = arith.constant 0 : index
    %c0_30 = arith.constant 0 : index
    %39 = vector.load %arg13[%c0_29, %c0_30] : memref<128x128xf32, #tpu.memory_space<vmem>>, vector<128x128xf32>
    tpu.vector_store %arg13[%c0_29, %c0_30], %13 {strides = array<i32>} : memref<128x128xf32, #tpu.memory_space<vmem>>, vector<128x128xf32>,
    return
  }
  func.func @transform_0(%arg0: i32) -> (i32, i32) {
    %c0_i32 = arith.constant 0 : i32
    %c0_i32_0 = arith.constant 0 : i32
    return %arg0, %c0_i32 : i32, i32
  }
  func.func @transform_1(%arg0: i32) -> (i32, i32) {
    %c0_i32 = arith.constant 0 : i32
    %c0_i32_0 = arith.constant 0 : i32
    return %arg0, %c0_i32 : i32, i32
  }
  func.func @transform_2(%arg0: i32) -> (i32, i32) {
    %c0_i32 = arith.constant 0 : i32
    %c0_i32_0 = arith.constant 0 : i32
    %c0_i32_1 = arith.constant 0 : i32
    return %c0_i32, %c0_i32_0 : i32, i32
  }
  func.func @transform_3(%arg0: i32) -> (i32, i32) {
    %c0_i32 = arith.constant 0 : i32
    %c0_i32_0 = arith.constant 0 : i32
    %c0_i32_1 = arith.constant 0 : i32
    return %c0_i32, %c0_i32_0 : i32, i32
  }
  func.func @transform_4(%arg0: i32) -> (i32, i32) {
    %c0_i32 = arith.constant 0 : i32
    %c0_i32_0 = arith.constant 0 : i32
    %c0_i32_1 = arith.constant 0 : i32
    return %c0_i32, %c0_i32_0 : i32, i32
  }
  func.func @transform_5(%arg0: i32) -> (i32, i32) {
    %c0_i32 = arith.constant 0 : i32
    %c0_i32_0 = arith.constant 0 : i32
    %c0_i32_1 = arith.constant 0 : i32
    return %c0_i32, %c0_i32_0 : i32, i32
  }
  func.func @transform_6(%arg0: i32) -> (i32, i32) {
    %c0_i32 = arith.constant 0 : i32
    %c0_i32_0 = arith.constant 0 : i32
    %c0_i32_1 = arith.constant 0 : i32
    return %c0_i32, %c0_i32_0 : i32, i32
  }
  func.func @transform_7(%arg0: i32) -> (i32, i32) {
    %c0_i32 = arith.constant 0 : i32
    %c0_i32_0 = arith.constant 0 : i32
    %c0_i32_1 = arith.constant 0 : i32
    return %c0_i32, %c0_i32_0 : i32, i32
  }
  func.func @transform_8(%arg0: i32) -> (i32, i32) {
    %c0_i32 = arith.constant 0 : i32
    %c0_i32_0 = arith.constant 0 : i32
    %c0_i32_1 = arith.constant 0 : i32
    return %c0_i32, %c0_i32_0 : i32, i32
  }
  func.func @transform_9(%arg0: i32) -> (i32, i32) {
    %c0_i32 = arith.constant 0 : i32
    %c0_i32_0 = arith.constant 0 : i32
    %c0_i32_1 = arith.constant 0 : i32
    return %c0_i32, %c0_i32_0 : i32, i32
  }
  func.func @transform_10(%arg0: i32) -> (i32, i32) {
    %c0_i32 = arith.constant 0 : i32
    %c0_i32_0 = arith.constant 0 : i32
    return %arg0, %c0_i32 : i32, i32
  }
  func.func @transform_11(%arg0: i32) -> (i32, i32) {
    %c0_i32 = arith.constant 0 : i32
    %c0_i32_0 = arith.constant 0 : i32
    return %arg0, %c0_i32 : i32, i32
  }
  func.func @transform_12(%arg0: i32) -> (i32, i32) {
    %c0_i32 = arith.constant 0 : i32
    %c0_i32_0 = arith.constant 0 : i32
    return %arg0, %c0_i32 : i32, i32
  }
}

</mosaic_0001>

<llo_original>
// kernel: vae_forward.1
$region0: #{vae_forward.1}
  #allocation0 [shape = 'u32[]', space=smem, size = 0x4, offset = 0x4, fixed_abs, tag = 'smem constant byte address 0x4 - core index']
  #allocation1 [shape = 'u32[144,128]{1,0:T(1,128)}', space=vmem, size = 0x12000, scoped, tag = 'internal scratch']
  %s0 = inlined_call_operand.vmem [shape: bf16[256,256], index: 0, kind: input, shape index: {}]
  %s1 = inlined_call_operand.vmem [shape: f32[256,64], index: 1, kind: input, shape index: {}]
  %s2 = inlined_call_operand.vmem [shape: bf16[256,128], index: 2, kind: input, shape index: {}]
  %s3 = inlined_call_operand.vmem [shape: f32[1,128], index: 3, kind: input, shape index: {}]
  %s4 = inlined_call_operand.hbm [shape: bf16[128,128], index: 4, kind: input, shape index: {}]
  %s5 = inlined_call_operand.vmem [shape: f32[1,128], index: 5, kind: input, shape index: {}]
  %s6 = inlined_call_operand.hbm [shape: bf16[64,128], index: 6, kind: input, shape index: {}]
  %s7 = inlined_call_operand.vmem [shape: f32[1,128], index: 7, kind: input, shape index: {}]
  %s8 = inlined_call_operand.hbm [shape: bf16[128,256], index: 8, kind: input, shape index: {}]
  %s9 = inlined_call_operand.vmem [shape: f32[1,256], index: 9, kind: input, shape index: {}]
  %s10 = inlined_call_operand.hbm [shape: bf16[256,256], index: 10, kind: output, shape index: {0}]
  %s11 = inlined_call_operand.vmem [shape: f32[256,64], index: 11, kind: output, shape index: {1}]
  %s12 = inlined_call_operand.vmem [shape: f32[256,128], index: 12, kind: output, shape index: {2}]
  %13 = xla_tuple %s10, %s11, %s12
  %s14 = sld [smem:[#allocation0]]
  $region101: #{vae_forward.1} parent=0
    _
  %s16 = ssub.s32 1, %s14
  %s17 = scalar_select 0, %s16, %s14
  $region1: #{vae_forward.1} parent=0
    #allocation2 [shape = 'u8[32768]{0}', space=vmem, size = 0x8000, scoped, tag = 'input window, operand 4, single buffered']
    #allocation3 [shape = 's32[2]{0}', space=sflag, size = 0x8, scoped, tag = 'scoped memory for vae_forward.1']
    #allocation4 [shape = 's32[2]{0}', space=sflag, size = 0x8, scoped, tag = 'scoped memory for vae_forward.1']
    #allocation5 [shape = 'u8[16384]{0}', space=vmem, size = 0x4000, scoped, tag = 'input window, operand 6, single buffered']
    #allocation6 [shape = 's32[1]{0}', space=sflag, size = 0x4, scoped, tag = 'scoped memory for vae_forward.1']
    #allocation7 [shape = 'u8[65536]{0}', space=vmem, size = 0x10000, scoped, tag = 'input window, operand 8, single buffered']
    #allocation8 [shape = 'u8[131072]{0}', space=vmem, size = 0x20000, scoped, tag = 'output window, operand 0']
    %18 = vsyncpa [#allocation3], 0
    %19 = vsyncpa [#allocation6], 0
    %20 = vsyncpa [#allocation4], 0
    %s21 = scalar_lea.sflag [#allocation4], 1
    %22 = vsyncpa %s21, 0
    loop: start=0, step=1, limit=4
    $region2: #{vae_forward.1} parent=1 // loop_pre_header
      _
    $region3: #{vae_forward.1} parent=1 // loop_header
      %s24 = sphi 0, %s28
      %p25 = scmp.ge.s32.totalorder %s24, 4
      %s34 = sphi 0, %s36
      %s37 = sphi 0, %s34
      %s38 = sphi 0, %s37
      %s54 = sphi 0, %s38
      %s60 = sphi 0, %s62
      %s63 = sphi 0, %s60
      %s64 = sphi 0, %s63
      %s80 = sphi 0, %s64
      %s84 = sphi 0, %s84
      %s86 = sphi 0, %s84
      %s87 = sphi 0, %s86
      %s101 = sphi 0, %s87
      %s105 = sphi 0, %s105
      %s107 = sphi 0, %s105
      %s108 = sphi 0, %s107
      %s122 = sphi 0, %s108
      %s126 = sphi 0, %s126
      %s128 = sphi 0, %s126
      %s129 = sphi 0, %s128
      %s143 = sphi 0, %s129
      %s147 = sphi 0, %s147
      %s149 = sphi 0, %s147
      %s150 = sphi 0, %s149
      %s164 = sphi 0, %s150
      %s168 = sphi 0, %s168
      %s170 = sphi 0, %s168
      %s171 = sphi 0, %s170
      %s185 = sphi 0, %s171
      %s189 = sphi 0, %s189
      %s191 = sphi 0, %s189
      %s192 = sphi 0, %s191
      %s206 = sphi 0, %s192
      %s210 = sphi 0, %s210
      %s212 = sphi 0, %s210
      %s213 = sphi 0, %s212
      %s227 = sphi 0, %s213
      %s231 = sphi 0, %s231
      %s233 = sphi 0, %s231
      %s234 = sphi 0, %s233
      %s248 = sphi 0, %s234
      %s254 = sphi 0, %s256
      %s257 = sphi 0, %s254
      %s258 = sphi 0, %s257
      %s274 = sphi 0, %s258
      %s280 = sphi 0, %s282
      %s283 = sphi 0, %s280
      %s284 = sphi 0, %s283
      %s300 = sphi 0, %s284
      %s306 = sphi 0, %s308
      %s309 = sphi 0, %s306
      %s310 = sphi 0, %s309
      %s326 = sphi 0, %s310
    $region4: #{vae_forward.1} parent=1 // loop_header_branch
      %27 = sbr.rel (%p25) target = $region8
    $region5: #{vae_forward.1} parent=1 // loop_body
      %s29 = ssub.s32 %s24, 1
      %s30 = ssub.s32 %s24, 2
      %s31 = sadd.s32 %s24, 1
      %s32 = ssub.s32 %s24, %s31
      %p33 = scmp.eq.s32.totalorder %s32, 0
      %s35 = sadd.s32 %s34, 1
      %s36 = scalar_select %p33, %s34, %s35
      %p39 = pneg %p33
      %p40 = scmp.eq.s32.totalorder %s24, 1
      %p41 = por %p39, %p40
      %p42 = scmp.ne.s32.totalorder %s34, %s37
      %p43 = scmp.eq.s32.totalorder %s24, 0
      %p44 = por %p42, %p43
      %p45 = scmp.ne.s32.totalorder %s34, %s37
      %p46 = scmp.eq.s32.totalorder %s29, 1
      %p47 = por %p45, %p46
      %p48 = scmp.ne.s32.totalorder %s37, %s38
      %p49 = scmp.eq.s32.totalorder %s29, 0
      %p50 = por %p48, %p49
      %p51 = scmp.ne.s32.totalorder %s37, %s38
      %p52 = scmp.eq.s32.totalorder %s30, 1
      %p53 = por %p51, %p52
      %p55 = scmp.ne.s32.totalorder %s38, %s54
      %p56 = scmp.eq.s32.totalorder %s30, 0
      %p57 = por %p55, %p56
      %s58 = ssub.s32 %s24, %s31
      %p59 = scmp.eq.s32.totalorder %s58, 0
      %s61 = sadd.s32 %s60, 1
      %s62 = scalar_select %p59, %s60, %s61
      %p65 = pneg %p59
      %p66 = scmp.eq.s32.totalorder %s24, 1
      %p67 = por %p65, %p66
      %p68 = scmp.ne.s32.totalorder %s60, %s63
      %p69 = scmp.eq.s32.totalorder %s24, 0
      %p70 = por %p68, %p69
      %p71 = scmp.ne.s32.totalorder %s60, %s63
      %p72 = scmp.eq.s32.totalorder %s29, 1
      %p73 = por %p71, %p72
      %p74 = scmp.ne.s32.totalorder %s63, %s64
      %p75 = scmp.eq.s32.totalorder %s29, 0
      %p76 = por %p74, %p75
      %p77 = scmp.ne.s32.totalorder %s63, %s64
      %p78 = scmp.eq.s32.totalorder %s30, 1
      %p79 = por %p77, %p78
      %p81 = scmp.ne.s32.totalorder %s64, %s80
      %p82 = scmp.eq.s32.totalorder %s30, 0
      %p83 = por %p81, %p82
      %s85 = sadd.s32 %s84, 1
      %p88 = scmp.eq.s32.totalorder %s24, 1
      %p89 = scmp.ne.s32.totalorder %s84, %s86
      %p90 = scmp.eq.s32.totalorder %s24, 0
      %p91 = por %p89, %p90
      %p92 = scmp.ne.s32.totalorder %s84, %s86
      %p93 = scmp.eq.s32.totalorder %s29, 1
      %p94 = por %p92, %p93
      %p95 = scmp.ne.s32.totalorder %s86, %s87
      %p96 = scmp.eq.s32.totalorder %s29, 0
      %p97 = por %p95, %p96
      %p98 = scmp.ne.s32.totalorder %s86, %s87
      %p99 = scmp.eq.s32.totalorder %s30, 1
      %p100 = por %p98, %p99
      %p102 = scmp.ne.s32.totalorder %s87, %s101
      %p103 = scmp.eq.s32.totalorder %s30, 0
      %p104 = por %p102, %p103
      %s106 = sadd.s32 %s105, 1
      %p109 = scmp.eq.s32.totalorder %s24, 1
      %p110 = scmp.ne.s32.totalorder %s105, %s107
      %p111 = scmp.eq.s32.totalorder %s24, 0
      %p112 = por %p110, %p111
      %p113 = scmp.ne.s32.totalorder %s105, %s107
      %p114 = scmp.eq.s32.totalorder %s29, 1
      %p115 = por %p113, %p114
      %p116 = scmp.ne.s32.totalorder %s107, %s108
      %p117 = scmp.eq.s32.totalorder %s29, 0
      %p118 = por %p116, %p117
      %p119 = scmp.ne.s32.totalorder %s107, %s108
      %p120 = scmp.eq.s32.totalorder %s30, 1
      %p121 = por %p119, %p120
      %p123 = scmp.ne.s32.totalorder %s108, %s122
      %p124 = scmp.eq.s32.totalorder %s30, 0
      %p125 = por %p123, %p124
      %s127 = sadd.s32 %s126, 1
      %p130 = scmp.eq.s32.totalorder %s24, 1
      %p131 = scmp.ne.s32.totalorder %s126, %s128
      %p132 = scmp.eq.s32.totalorder %s24, 0
      %p133 = por %p131, %p132
      %p134 = scmp.ne.s32.totalorder %s126, %s128
      %p135 = scmp.eq.s32.totalorder %s29, 1
      %p136 = por %p134, %p135
      %p137 = scmp.ne.s32.totalorder %s128, %s129
      %p138 = scmp.eq.s32.totalorder %s29, 0
      %p139 = por %p137, %p138
      %p140 = scmp.ne.s32.totalorder %s128, %s129
      %p141 = scmp.eq.s32.totalorder %s30, 1
      %p142 = por %p140, %p141
      %p144 = scmp.ne.s32.totalorder %s129, %s143
      %p145 = scmp.eq.s32.totalorder %s30, 0
      %p146 = por %p144, %p145
      %s148 = sadd.s32 %s147, 1
      %p151 = scmp.eq.s32.totalorder %s24, 1
      %p152 = scmp.ne.s32.totalorder %s147, %s149
      %p153 = scmp.eq.s32.totalorder %s24, 0
      %p154 = por %p152, %p153
      %p155 = scmp.ne.s32.totalorder %s147, %s149
      %p156 = scmp.eq.s32.totalorder %s29, 1
      %p157 = por %p155, %p156
      %p158 = scmp.ne.s32.totalorder %s149, %s150
      %p159 = scmp.eq.s32.totalorder %s29, 0
      %p160 = por %p158, %p159
      %p161 = scmp.ne.s32.totalorder %s149, %s150
      %p162 = scmp.eq.s32.totalorder %s30, 1
      %p163 = por %p161, %p162
      %p165 = scmp.ne.s32.totalorder %s150, %s164
      %p166 = scmp.eq.s32.totalorder %s30, 0
      %p167 = por %p165, %p166
      %s169 = sadd.s32 %s168, 1
      %p172 = scmp.eq.s32.totalorder %s24, 1
      %p173 = scmp.ne.s32.totalorder %s168, %s170
      %p174 = scmp.eq.s32.totalorder %s24, 0
      %p175 = por %p173, %p174
      %p176 = scmp.ne.s32.totalorder %s168, %s170
      %p177 = scmp.eq.s32.totalorder %s29, 1
      %p178 = por %p176, %p177
      %p179 = scmp.ne.s32.totalorder %s170, %s171
      %p180 = scmp.eq.s32.totalorder %s29, 0
      %p181 = por %p179, %p180
      %p182 = scmp.ne.s32.totalorder %s170, %s171
      %p183 = scmp.eq.s32.totalorder %s30, 1
      %p184 = por %p182, %p183
      %p186 = scmp.ne.s32.totalorder %s171, %s185
      %p187 = scmp.eq.s32.totalorder %s30, 0
      %p188 = por %p186, %p187
      %s190 = sadd.s32 %s189, 1
      %p193 = scmp.eq.s32.totalorder %s24, 1
      %p194 = scmp.ne.s32.totalorder %s189, %s191
      %p195 = scmp.eq.s32.totalorder %s24, 0
      %p196 = por %p194, %p195
      %p197 = scmp.ne.s32.totalorder %s189, %s191
      %p198 = scmp.eq.s32.totalorder %s29, 1
      %p199 = por %p197, %p198
      %p200 = scmp.ne.s32.totalorder %s191, %s192
      %p201 = scmp.eq.s32.totalorder %s29, 0
      %p202 = por %p200, %p201
      %p203 = scmp.ne.s32.totalorder %s191, %s192
      %p204 = scmp.eq.s32.totalorder %s30, 1
      %p205 = por %p203, %p204
      %p207 = scmp.ne.s32.totalorder %s192, %s206
      %p208 = scmp.eq.s32.totalorder %s30, 0
      %p209 = por %p207, %p208
      %s211 = sadd.s32 %s210, 1
      %p214 = scmp.eq.s32.totalorder %s24, 1
      %p215 = scmp.ne.s32.totalorder %s210, %s212
      %p216 = scmp.eq.s32.totalorder %s24, 0
      %p217 = por %p215, %p216
      %p218 = scmp.ne.s32.totalorder %s210, %s212
      %p219 = scmp.eq.s32.totalorder %s29, 1
      %p220 = por %p218, %p219
      %p221 = scmp.ne.s32.totalorder %s212, %s213
      %p222 = scmp.eq.s32.totalorder %s29, 0
      %p223 = por %p221, %p222
      %p224 = scmp.ne.s32.totalorder %s212, %s213
      %p225 = scmp.eq.s32.totalorder %s30, 1
      %p226 = por %p224, %p225
      %p228 = scmp.ne.s32.totalorder %s213, %s227
      %p229 = scmp.eq.s32.totalorder %s30, 0
      %p230 = por %p228, %p229
      %s232 = sadd.s32 %s231, 1
      %p235 = scmp.eq.s32.totalorder %s24, 1
      %p236 = scmp.ne.s32.totalorder %s231, %s233
      %p237 = scmp.eq.s32.totalorder %s24, 0
      %p238 = por %p236, %p237
      %p239 = scmp.ne.s32.totalorder %s231, %s233
      %p240 = scmp.eq.s32.totalorder %s29, 1
      %p241 = por %p239, %p240
      %p242 = scmp.ne.s32.totalorder %s233, %s234
      %p243 = scmp.eq.s32.totalorder %s29, 0
      %p244 = por %p242, %p243
      %p245 = scmp.ne.s32.totalorder %s233, %s234
      %p246 = scmp.eq.s32.totalorder %s30, 1
      %p247 = por %p245, %p246
      %p249 = scmp.ne.s32.totalorder %s234, %s248
      %p250 = scmp.eq.s32.totalorder %s30, 0
      %p251 = por %p249, %p250
      %s252 = ssub.s32 %s24, %s31
      %p253 = scmp.eq.s32.totalorder %s252, 0
      %s255 = sadd.s32 %s254, 1
      %s256 = scalar_select %p253, %s254, %s255
      %p259 = pneg %p253
      %p260 = scmp.eq.s32.totalorder %s24, 1
      %p261 = por %p259, %p260
      %p262 = scmp.ne.s32.totalorder %s254, %s257
      %p263 = scmp.eq.s32.totalorder %s24, 0
      %p264 = por %p262, %p263
      %p265 = scmp.ne.s32.totalorder %s254, %s257
      %p266 = scmp.eq.s32.totalorder %s29, 1
      %p267 = por %p265, %p266
      %p268 = scmp.ne.s32.totalorder %s257, %s258
      %p269 = scmp.eq.s32.totalorder %s29, 0
      %p270 = por %p268, %p269
      %p271 = scmp.ne.s32.totalorder %s257, %s258
      %p272 = scmp.eq.s32.totalorder %s30, 1
      %p273 = por %p271, %p272
      %p275 = scmp.ne.s32.totalorder %s258, %s274
      %p276 = scmp.eq.s32.totalorder %s30, 0
      %p277 = por %p275, %p276
      %s278 = ssub.s32 %s24, %s31
      %p279 = scmp.eq.s32.totalorder %s278, 0
      %s281 = sadd.s32 %s280, 1
      %s282 = scalar_select %p279, %s280, %s281
      %p285 = pneg %p279
      %p286 = scmp.eq.s32.totalorder %s24, 1
      %p287 = por %p285, %p286
      %p288 = scmp.ne.s32.totalorder %s280, %s283
      %p289 = scmp.eq.s32.totalorder %s24, 0
      %p290 = por %p288, %p289
      %p291 = scmp.ne.s32.totalorder %s280, %s283
      %p292 = scmp.eq.s32.totalorder %s29, 1
      %p293 = por %p291, %p292
      %p294 = scmp.ne.s32.totalorder %s283, %s284
      %p295 = scmp.eq.s32.totalorder %s29, 0
      %p296 = por %p294, %p295
      %p297 = scmp.ne.s32.totalorder %s283, %s284
      %p298 = scmp.eq.s32.totalorder %s30, 1
      %p299 = por %p297, %p298
      %p301 = scmp.ne.s32.totalorder %s284, %s300
      %p302 = scmp.eq.s32.totalorder %s30, 0
      %p303 = por %p301, %p302
      %s304 = ssub.s32 %s24, %s31
      %p305 = scmp.eq.s32.totalorder %s304, 0
      %s307 = sadd.s32 %s306, 1
      %s308 = scalar_select %p305, %s306, %s307
      %p311 = pneg %p305
      %p312 = scmp.eq.s32.totalorder %s24, 1
      %p313 = por %p311, %p312
      %p314 = scmp.ne.s32.totalorder %s306, %s309
      %p315 = scmp.eq.s32.totalorder %s24, 0
      %p316 = por %p314, %p315
      %p317 = scmp.ne.s32.totalorder %s306, %s309
      %p318 = scmp.eq.s32.totalorder %s29, 1
      %p319 = por %p317, %p318
      %p320 = scmp.ne.s32.totalorder %s309, %s310
      %p321 = scmp.eq.s32.totalorder %s29, 0
      %p322 = por %p320, %p321
      %p323 = scmp.ne.s32.totalorder %s309, %s310
      %p324 = scmp.eq.s32.totalorder %s30, 1
      %p325 = por %p323, %p324
      %p327 = scmp.ne.s32.totalorder %s310, %s326
      %p328 = scmp.eq.s32.totalorder %s30, 0
      %p329 = por %p327, %p328
      %p330 = scmp.le.s32.totalorder 1, %s24
      %p331 = scmp.lt.s32.totalorder %s24, 3
      %p332 = pnand %p330, %p331
      %p333 = pneg %p332
      // Predicated region
      $region9: #{vae_forward.1} parent=5 // pred_check
        _
      $region10: #{vae_forward.1} parent=5 // pred_check_branch
        %335 = sbr.rel (%p332) target = $region12
      $region11: #{vae_forward.1} parent=5 // pred_region
        %s336 = ssub.s32 %s24, 1
        // Predicated region
        $region13: #{vae_forward.1} parent=11 // pred_check
          %p337 = pneg %p97
        $region14: #{vae_forward.1} parent=11 // pred_check_branch
          %339 = sbr.rel (%p337) target = $region16
        $region15: #{vae_forward.1} parent=11 // pred_region
          _
        $region16: #{vae_forward.1} parent=11 // pred_fallthru
          _
        // Predicated region
        $region17: #{vae_forward.1} parent=11 // pred_check
          %p340 = pneg %p118
        $region18: #{vae_forward.1} parent=11 // pred_check_branch
          %342 = sbr.rel (%p340) target = $region20
        $region19: #{vae_forward.1} parent=11 // pred_region
          _
        $region20: #{vae_forward.1} parent=11 // pred_fallthru
          _
        // Predicated region
        $region21: #{vae_forward.1} parent=11 // pred_check
          %p343 = pneg %p139
        $region22: #{vae_forward.1} parent=11 // pred_check_branch
          %345 = sbr.rel (%p343) target = $region24
        $region23: #{vae_forward.1} parent=11 // pred_region
          %s347 = ssub.s32 1024, 1024
          %348 = vsyncadd [#allocation3], %s347
          %s349 = sshll.u32 [#allocation2], 4
          %s350 = int_to_ptr.vmem [resolvable:$true] %s349
          %355 = dma.hbm_to_vmem [thread:$0]  %s4, 1024, %s350, [#allocation3], 64, 64, 4
        $region24: #{vae_forward.1} parent=11 // pred_fallthru
          _
        // Predicated region
        $region25: #{vae_forward.1} parent=11 // pred_check
          %p356 = pneg %p160
        $region26: #{vae_forward.1} parent=11 // pred_check_branch
          %358 = sbr.rel (%p356) target = $region28
        $region27: #{vae_forward.1} parent=11 // pred_region
          _
        $region28: #{vae_forward.1} parent=11 // pred_fallthru
          _
        // Predicated region
        $region29: #{vae_forward.1} parent=11 // pred_check
          %p359 = pneg %p181
        $region30: #{vae_forward.1} parent=11 // pred_check_branch
          %361 = sbr.rel (%p359) target = $region32
        $region31: #{vae_forward.1} parent=11 // pred_region
          %s363 = ssub.s32 512, 512
          %364 = vsyncadd [#allocation6], %s363
          %s365 = sshll.u32 [#allocation5], 4
          %s366 = int_to_ptr.vmem [resolvable:$true] %s365
          %371 = dma.hbm_to_vmem [thread:$0]  %s6, 512, %s366, [#allocation6], 64, 64, 4
        $region32: #{vae_forward.1} parent=11 // pred_fallthru
          _
        // Predicated region
        $region33: #{vae_forward.1} parent=11 // pred_check
          %p372 = pneg %p202
        $region34: #{vae_forward.1} parent=11 // pred_check_branch
          %374 = sbr.rel (%p372) target = $region36
        $region35: #{vae_forward.1} parent=11 // pred_region
          _
        $region36: #{vae_forward.1} parent=11 // pred_fallthru
          _
        // Predicated region
        $region37: #{vae_forward.1} parent=11 // pred_check
          %p375 = pneg %p223
        $region38: #{vae_forward.1} parent=11 // pred_check_branch
          %377 = sbr.rel (%p375) target = $region40
        $region39: #{vae_forward.1} parent=11 // pred_region
          %s379 = ssub.s32 2048, 2048
          %380 = vsyncadd [#allocation6], %s379
          %s381 = sshll.u32 [#allocation7], 4
          %s382 = int_to_ptr.vmem [resolvable:$true] %s381
          %387 = dma.hbm_to_vmem [thread:$0]  %s8, 2048, %s382, [#allocation6], 128, 128, 8
        $region40: #{vae_forward.1} parent=11 // pred_fallthru
          _
        // Predicated region
        $region41: #{vae_forward.1} parent=11 // pred_check
          %p388 = pneg %p244
        $region42: #{vae_forward.1} parent=11 // pred_check_branch
          %390 = sbr.rel (%p388) target = $region44
        $region43: #{vae_forward.1} parent=11 // pred_region
          _
        $region44: #{vae_forward.1} parent=11 // pred_fallthru
          _
      $region12: #{vae_forward.1} parent=5 // pred_fallthru
        _
      %p391 = scmp.lt.s32.totalorder %s24, 2
      // Predicated region
      $region45: #{vae_forward.1} parent=5 // pred_check
        %p392 = pneg %p391
      $region46: #{vae_forward.1} parent=5 // pred_check_branch
        %394 = sbr.rel (%p392) target = $region48
      $region47: #{vae_forward.1} parent=5 // pred_region
        // Predicated region
        $region49: #{vae_forward.1} parent=47 // pred_check
          %p395 = pneg %p44
        $region50: #{vae_forward.1} parent=47 // pred_check_branch
          %397 = sbr.rel (%p395) target = $region52
        $region51: #{vae_forward.1} parent=47 // pred_region
          %s398 = smul.u32 16, %s24
          %p399 = scmp.lt.s32.totalorder %s398, 31
          %s400 = scalar_select %p399, %s398, 31
          %s401 = smul.addr %s400, 2
          %s402 = smul.addr %s401, 4
          %s403 = scalar_lea.vmem %s0, %s402
          %s404 = smul.u32 16, %s24
        $region52: #{vae_forward.1} parent=47 // pred_fallthru
          _
        // Predicated region
        $region53: #{vae_forward.1} parent=47 // pred_check
          %p405 = pneg %p70
        $region54: #{vae_forward.1} parent=47 // pred_check_branch
          %407 = sbr.rel (%p405) target = $region56
        $region55: #{vae_forward.1} parent=47 // pred_region
          %s408 = smul.u32 16, %s24
          %p409 = scmp.lt.s32.totalorder %s408, 31
          %s410 = scalar_select %p409, %s408, 31
          %s411 = smul.addr %s410, 8
          %s412 = scalar_lea.vmem %s1, %s411
          %s413 = smul.u32 16, %s24
        $region56: #{vae_forward.1} parent=47 // pred_fallthru
          _
      $region48: #{vae_forward.1} parent=5 // pred_fallthru
        _
      %p414 = scmp.le.s32.totalorder 1, %s24
      %p415 = scmp.lt.s32.totalorder %s24, 3
      %p416 = pnand %p414, %p415
      %p417 = pneg %p416
      // Predicated region
      $region57: #{vae_forward.1} parent=5 // pred_check
        _
      $region58: #{vae_forward.1} parent=5 // pred_check_branch
        %419 = sbr.rel (%p416) target = $region60
      $region59: #{vae_forward.1} parent=5 // pred_region
        %s420 = ssub.s32 %s24, 1
        // Predicated region
        $region61: #{vae_forward.1} parent=59 // pred_check
          %p421 = pneg %p139
        $region62: #{vae_forward.1} parent=59 // pred_check_branch
          %423 = sbr.rel (%p421) target = $region64
        $region63: #{vae_forward.1} parent=59 // pred_region
          %424 = dma.done [#allocation3], 1024
        $region64: #{vae_forward.1} parent=59 // pred_fallthru
          _
        // Predicated region
        $region65: #{vae_forward.1} parent=59 // pred_check
          %p425 = pneg %p181
        $region66: #{vae_forward.1} parent=59 // pred_check_branch
          %427 = sbr.rel (%p425) target = $region68
        $region67: #{vae_forward.1} parent=59 // pred_region
          %428 = dma.done [#allocation6], 512
        $region68: #{vae_forward.1} parent=59 // pred_fallthru
          _
        // Predicated region
        $region69: #{vae_forward.1} parent=59 // pred_check
          %p429 = pneg %p223
        $region70: #{vae_forward.1} parent=59 // pred_check_branch
          %431 = sbr.rel (%p429) target = $region72
        $region71: #{vae_forward.1} parent=59 // pred_region
          %432 = dma.done [#allocation6], 2048
        $region72: #{vae_forward.1} parent=59 // pred_fallthru
          _
        %s433 = smul.u32 16, %s29
        %p434 = scmp.lt.s32.totalorder %s433, 31
        %s435 = scalar_select %p434, %s433, 31
        %s436 = smul.addr %s435, 2
        %s437 = smul.addr %s436, 4
        %s438 = scalar_lea.vmem %s0, %s437
        %p439 = pneg %p50
        %p440 = pneg %p47
        %s441 = smul.u32 16, %s29
        %p442 = scmp.lt.s32.totalorder %s441, 31
        %s443 = scalar_select %p442, %s441, 31
        %s444 = smul.addr %s443, 8
        %s445 = scalar_lea.vmem %s1, %s444
        %p446 = pneg %p76
        %p447 = pneg %p73
        %p448 = pneg %p97
        %p449 = pneg %p94
        %p450 = pneg %p118
        %p451 = pneg %p115
        %p452 = pneg %p139
        %p453 = pneg %p136
        %p454 = pneg %p160
        %p455 = pneg %p157
        %p456 = pneg %p181
        %p457 = pneg %p178
        %p458 = pneg %p202
        %p459 = pneg %p199
        %p460 = pneg %p223
        %p461 = pneg %p220
        %p462 = pneg %p244
        %p463 = pneg %p241
        %p464 = pneg %p270
        %p465 = pneg %p267
        %s466 = sand.u32 %s257, 1
        %s467 = scalar_lea.sflag [#allocation4], %s466
        %s468 = sand.u32 %s257, 1
        %s469 = smul.addr %s468, 128
        %s470 = scalar_lea.vmem [#allocation8], %s469
        %p471 = pneg %p296
        %p472 = pneg %p293
        %s473 = smul.u32 16, %s29
        %p474 = scmp.lt.s32.totalorder %s473, 31
        %s475 = scalar_select %p474, %s473, 31
        %s476 = smul.addr %s475, 8
        %s477 = scalar_lea.vmem %s11, %s476
        %p478 = pneg %p322
        %p479 = pneg %p319
        %s480 = smul.u32 16, %s29
        %p481 = scmp.lt.s32.totalorder %s480, 31
        %s482 = scalar_select %p481, %s480, 31
        %s483 = smul.addr %s482, 8
        %s484 = scalar_lea.vmem %s12, %s483
        %s485 = smul.u32 16, %s29
        %p486 = scmp.lt.s32.totalorder %s485, 31
        %s487 = scalar_select %p486, %s485, 31
        %s488 = smul.addr %s487, 2
        %s489 = smul.addr %s488, 4
        %s490 = scalar_lea.vmem %s0, %s489
        %s491 = smul.u32 16, %s29
        %s492 = smul.u32 16, %s29
        %p493 = scmp.lt.s32.totalorder %s492, 31
        %s494 = scalar_select %p493, %s492, 31
        %s495 = smul.addr %s494, 8
        %s496 = scalar_lea.vmem %s1, %s495
        %s497 = smul.u32 16, %s29
        %s498 = smul.u32 16, %s29
        %s499 = smul.u32 16, %s29
        %p500 = scmp.lt.s32.totalorder %s499, 31
        %s501 = scalar_select %p500, %s499, 31
        %s502 = smul.addr %s501, 8
        %s503 = scalar_lea.vmem %s11, %s502
        %s504 = smul.u32 16, %s29
        %s505 = smul.u32 16, %s29
        %p506 = scmp.lt.s32.totalorder %s505, 31
        %s507 = scalar_select %p506, %s505, 31
        %s508 = smul.addr %s507, 8
        %s509 = scalar_lea.vmem %s12, %s508
        %s510 = smul.u32 16, %s29
        %v512 = vld [vmem:[%s490] sm:$0xff]
        %v513 = vld [vmem:[%s490 + $0x8] sm:$0xff]
        %v514 = vld [vmem:[%s490 + $0x10] sm:$0xff]
        %v515 = vld [vmem:[%s490 + $0x18] sm:$0xff]
        %v516 = vld [vmem:[%s490 + $0x20] sm:$0xff]
        %v517 = vld [vmem:[%s490 + $0x28] sm:$0xff]
        %v518 = vld [vmem:[%s490 + $0x30] sm:$0xff]
        %v519 = vld [vmem:[%s490 + $0x38] sm:$0xff]
        %v520 = vld [vmem:[%s490 + $0x40] sm:$0xff]
        %v521 = vld [vmem:[%s490 + $0x48] sm:$0xff]
        %v522 = vld [vmem:[%s490 + $0x50] sm:$0xff]
        %v523 = vld [vmem:[%s490 + $0x58] sm:$0xff]
        %v524 = vld [vmem:[%s490 + $0x60] sm:$0xff]
        %v525 = vld [vmem:[%s490 + $0x68] sm:$0xff]
        %v526 = vld [vmem:[%s490 + $0x70] sm:$0xff]
        %v527 = vld [vmem:[%s490 + $0x78] sm:$0xff]
        %v528 = vld [vmem:[%s2] sm:$0xf]
        %v529 = vld [vmem:[%s2 + $0x4] sm:$0xf]
        %v530 = vld [vmem:[%s2 + $0x8] sm:$0xf]
        %v531 = vld [vmem:[%s2 + $0xc] sm:$0xf]
        %v532 = vld [vmem:[%s2 + $0x10] sm:$0xf]
        %v533 = vld [vmem:[%s2 + $0x14] sm:$0xf]
        %v534 = vld [vmem:[%s2 + $0x18] sm:$0xf]
        %v535 = vld [vmem:[%s2 + $0x1c] sm:$0xf]
        %v536 = vld [vmem:[%s2 + $0x20] sm:$0xf]
        %v537 = vld [vmem:[%s2 + $0x24] sm:$0xf]
        %v538 = vld [vmem:[%s2 + $0x28] sm:$0xf]
        %v539 = vld [vmem:[%s2 + $0x2c] sm:$0xf]
        %v540 = vld [vmem:[%s2 + $0x30] sm:$0xf]
        %v541 = vld [vmem:[%s2 + $0x34] sm:$0xf]
        %v542 = vld [vmem:[%s2 + $0x38] sm:$0xf]
        %v543 = vld [vmem:[%s2 + $0x3c] sm:$0xf]
        %v544 = vld [vmem:[%s2 + $0x40] sm:$0xf]
        %v545 = vld [vmem:[%s2 + $0x44] sm:$0xf]
        %v546 = vld [vmem:[%s2 + $0x48] sm:$0xf]
        %v547 = vld [vmem:[%s2 + $0x4c] sm:$0xf]
        %v548 = vld [vmem:[%s2 + $0x50] sm:$0xf]
        %v549 = vld [vmem:[%s2 + $0x54] sm:$0xf]
        %v550 = vld [vmem:[%s2 + $0x58] sm:$0xf]
        %v551 = vld [vmem:[%s2 + $0x5c] sm:$0xf]
        %v552 = vld [vmem:[%s2 + $0x60] sm:$0xf]
        %v553 = vld [vmem:[%s2 + $0x64] sm:$0xf]
        %v554 = vld [vmem:[%s2 + $0x68] sm:$0xf]
        %v555 = vld [vmem:[%s2 + $0x6c] sm:$0xf]
        %v556 = vld [vmem:[%s2 + $0x70] sm:$0xf]
        %v557 = vld [vmem:[%s2 + $0x74] sm:$0xf]
        %v558 = vld [vmem:[%s2 + $0x78] sm:$0xf]
        %v559 = vld [vmem:[%s2 + $0x7c] sm:$0xf]
        %v560 = vld [vmem:[%s3] sm:$0x1]
        %v562 = vlaneseq
        %v563 = vshrl.u32 %v562, 7
        %v564 = vsub.s32 0, %v563
        %v565 = vrot.slane %v560, %v564
        %v583 = vunpack.c.l.b16 %v512
        %v584 = vunpack.c.h.b16 %v512
        %v585 = vunpack.c.l.b16 %v513
        %v586 = vunpack.c.h.b16 %v513
        %v587 = vunpack.c.l.b16 %v514
        %v588 = vunpack.c.h.b16 %v514
        %v589 = vunpack.c.l.b16 %v515
        %v590 = vunpack.c.h.b16 %v515
        %v591 = vunpack.c.l.b16 %v516
        %v592 = vunpack.c.h.b16 %v516
        %v593 = vunpack.c.l.b16 %v517
        %v594 = vunpack.c.h.b16 %v517
        %v595 = vunpack.c.l.b16 %v518
        %v596 = vunpack.c.h.b16 %v518
        %v597 = vunpack.c.l.b16 %v519
        %v598 = vunpack.c.h.b16 %v519
        %v599 = vunpack.c.l.b16 %v520
        %v600 = vunpack.c.h.b16 %v520
        %v601 = vunpack.c.l.b16 %v521
        %v602 = vunpack.c.h.b16 %v521
        %v603 = vunpack.c.l.b16 %v522
        %v604 = vunpack.c.h.b16 %v522
        %v605 = vunpack.c.l.b16 %v523
        %v606 = vunpack.c.h.b16 %v523
        %v607 = vunpack.c.l.b16 %v524
        %v608 = vunpack.c.h.b16 %v524
        %v609 = vunpack.c.l.b16 %v525
        %v610 = vunpack.c.h.b16 %v525
        %v611 = vunpack.c.l.b16 %v526
        %v612 = vunpack.c.h.b16 %v526
        %v613 = vunpack.c.l.b16 %v527
        %v614 = vunpack.c.h.b16 %v527
        %v615 = vpack.c.b16 %v585, %v583
        %v616 = vpack.c.b16 %v586, %v584
        %v617 = vpack.c.b16 %v589, %v587
        %v618 = vpack.c.b16 %v590, %v588
        %v619 = vpack.c.b16 %v593, %v591
        %v620 = vpack.c.b16 %v594, %v592
        %v621 = vpack.c.b16 %v597, %v595
        %v622 = vpack.c.b16 %v598, %v596
        %v623 = vpack.c.b16 %v601, %v599
        %v624 = vpack.c.b16 %v602, %v600
        %v625 = vpack.c.b16 %v605, %v603
        %v626 = vpack.c.b16 %v606, %v604
        %v627 = vpack.c.b16 %v609, %v607
        %v628 = vpack.c.b16 %v610, %v608
        %v629 = vpack.c.b16 %v613, %v611
        %v630 = vpack.c.b16 %v614, %v612
        %v679 = vunpack.c.l.b16 %v528
        %v680 = vunpack.c.l.b16 %v529
        %v681 = vunpack.c.l.b16 %v530
        %v682 = vunpack.c.l.b16 %v531
        %v683 = vunpack.c.l.b16 %v532
        %v684 = vunpack.c.l.b16 %v533
        %v685 = vunpack.c.l.b16 %v534
        %v686 = vunpack.c.l.b16 %v535
        %v687 = vunpack.c.l.b16 %v536
        %v688 = vunpack.c.l.b16 %v537
        %v689 = vunpack.c.l.b16 %v538
        %v690 = vunpack.c.l.b16 %v539
        %v691 = vunpack.c.l.b16 %v540
        %v692 = vunpack.c.l.b16 %v541
        %v693 = vunpack.c.l.b16 %v542
        %v694 = vunpack.c.l.b16 %v543
        %v695 = vunpack.c.l.b16 %v544
        %v696 = vunpack.c.l.b16 %v545
        %v697 = vunpack.c.l.b16 %v546
        %v698 = vunpack.c.l.b16 %v547
        %v699 = vunpack.c.l.b16 %v548
        %v700 = vunpack.c.l.b16 %v549
        %v701 = vunpack.c.l.b16 %v550
        %v702 = vunpack.c.l.b16 %v551
        %v703 = vunpack.c.l.b16 %v552
        %v704 = vunpack.c.l.b16 %v553
        %v705 = vunpack.c.l.b16 %v554
        %v706 = vunpack.c.l.b16 %v555
        %v707 = vunpack.c.l.b16 %v556
        %v708 = vunpack.c.l.b16 %v557
        %v709 = vunpack.c.l.b16 %v558
        %v710 = vunpack.c.l.b16 %v559
        %v711 = vpack.c.b16 %v680, %v679
        %v712 = vpack.c.b16 %v682, %v681
        %v713 = vpack.c.b16 %v684, %v683
        %v714 = vpack.c.b16 %v686, %v685
        %v715 = vpack.c.b16 %v688, %v687
        %v716 = vpack.c.b16 %v690, %v689
        %v717 = vpack.c.b16 %v692, %v691
        %v718 = vpack.c.b16 %v694, %v693
        %v719 = vpack.c.b16 %v696, %v695
        %v720 = vpack.c.b16 %v698, %v697
        %v721 = vpack.c.b16 %v700, %v699
        %v722 = vpack.c.b16 %v702, %v701
        %v723 = vpack.c.b16 %v704, %v703
        %v724 = vpack.c.b16 %v706, %v705
        %v725 = vpack.c.b16 %v708, %v707
        %v726 = vpack.c.b16 %v710, %v709
        %743 = vmatprep.subr.bf16.mxu0 0
        %744 = vmatpush1.bf16.msra.mxu0 %v711
        %745 = vmatprep.subr.bf16.mxu0 0
        %746 = vmatpush1.bf16.msra.mxu0 %v712
        %747 = vmatprep.subr.bf16.mxu0 0
        %748 = vmatpush1.bf16.msra.mxu0 %v713
        %749 = vmatprep.subr.bf16.mxu0 0
        %750 = vmatpush1.bf16.msra.mxu0 %v714
        %751 = vmatprep.subr.bf16.mxu0 0
        %752 = vmatpush1.bf16.msra.mxu0 %v715
        %753 = vmatprep.subr.bf16.mxu0 0
        %754 = vmatpush1.bf16.msra.mxu0 %v716
        %755 = vmatprep.subr.bf16.mxu0 0
        %756 = vmatpush1.bf16.msra.mxu0 %v717
        %757 = vmatprep.subr.bf16.mxu0 0
        %758 = vmatpush1.bf16.msra.mxu0 %v718
        %759 = vmatprep.subr.bf16.mxu0 0
        %760 = vmatpush1.bf16.msra.mxu0 %v719
        %761 = vmatprep.subr.bf16.mxu0 0
        %762 = vmatpush1.bf16.msra.mxu0 %v720
        %763 = vmatprep.subr.bf16.mxu0 0
        %764 = vmatpush1.bf16.msra.mxu0 %v721
        %765 = vmatprep.subr.bf16.mxu0 0
        %766 = vmatpush1.bf16.msra.mxu0 %v722
        %767 = vmatprep.subr.bf16.mxu0 0
        %768 = vmatpush1.bf16.msra.mxu0 %v723
        %769 = vmatprep.subr.bf16.mxu0 0
        %770 = vmatpush1.bf16.msra.mxu0 %v724
        %771 = vmatprep.subr.bf16.mxu0 0
        %772 = vmatpush1.bf16.msra.mxu0 %v725
        %773 = vmatprep.subr.bf16.mxu0 0
        %774 = vmatpush1.bf16.msra.mxu0 %v726
        %775 = vmatprep.mubr.bf16.mxu0 %v616
        %776 = vmatmul.mubr.bf16.gmra.mrb[0].mxu0 %v615
        %v777 = vpop.f32.mrb[0].mxu0
        %v778 = vadd.f32 %v565, %v777
        %v779 = vpop.f32.mrb[0].mxu0
        %v780 = vpop.f32.mrb[0].mxu0
        %v781 = vadd.f32 %v565, %v780
        %v782 = vpop.f32.mrb[0].mxu0
        %783 = vmatprep.mubr.bf16.mxu0 %v618
        %784 = vmatmul.mubr.bf16.gmra.mrb[0].mxu0 %v617
        %v785 = vpop.f32.mrb[0].mxu0
        %v786 = vadd.f32 %v565, %v785
        %v787 = vpop.f32.mrb[0].mxu0
        %v788 = vpop.f32.mrb[0].mxu0
        %v789 = vadd.f32 %v565, %v788
        %v790 = vpop.f32.mrb[0].mxu0
        %791 = vmatprep.mubr.bf16.mxu0 %v620
        %792 = vmatmul.mubr.bf16.gmra.mrb[0].mxu0 %v619
        %v793 = vpop.f32.mrb[0].mxu0
        %v794 = vadd.f32 %v565, %v793
        %v795 = vpop.f32.mrb[0].mxu0
        %v796 = vpop.f32.mrb[0].mxu0
        %v797 = vadd.f32 %v565, %v796
        %v798 = vpop.f32.mrb[0].mxu0
        %799 = vmatprep.mubr.bf16.mxu0 %v622
        %800 = vmatmul.mubr.bf16.gmra.mrb[0].mxu0 %v621
        %v801 = vpop.f32.mrb[0].mxu0
        %v802 = vadd.f32 %v565, %v801
        %v803 = vpop.f32.mrb[0].mxu0
        %v804 = vpop.f32.mrb[0].mxu0
        %v805 = vadd.f32 %v565, %v804
        %v806 = vpop.f32.mrb[0].mxu0
        %807 = vmatprep.mubr.bf16.mxu0 %v624
        %808 = vmatmul.mubr.bf16.gmra.mrb[0].mxu0 %v623
        %v809 = vpop.f32.mrb[0].mxu0
        %v810 = vadd.f32 %v565, %v809
        %v811 = vpop.f32.mrb[0].mxu0
        %v812 = vpop.f32.mrb[0].mxu0
        %v813 = vadd.f32 %v565, %v812
        %v814 = vpop.f32.mrb[0].mxu0
        %815 = vmatprep.mubr.bf16.mxu0 %v626
        %816 = vmatmul.mubr.bf16.gmra.mrb[0].mxu0 %v625
        %v817 = vpop.f32.mrb[0].mxu0
        %v818 = vadd.f32 %v565, %v817
        %v819 = vpop.f32.mrb[0].mxu0
        %v820 = vpop.f32.mrb[0].mxu0
        %v821 = vadd.f32 %v565, %v820
        %v822 = vpop.f32.mrb[0].mxu0
        %823 = vmatprep.mubr.bf16.mxu0 %v628
        %824 = vmatmul.mubr.bf16.gmra.mrb[0].mxu0 %v627
        %v825 = vpop.f32.mrb[0].mxu0
        %v826 = vadd.f32 %v565, %v825
        %v827 = vpop.f32.mrb[0].mxu0
        %v828 = vpop.f32.mrb[0].mxu0
        %v829 = vadd.f32 %v565, %v828
        %v830 = vpop.f32.mrb[0].mxu0
        %831 = vmatprep.mubr.bf16.mxu0 %v630
        %832 = vmatmul.mubr.bf16.gmra.mrb[0].mxu0 %v629
        %v833 = vpop.f32.mrb[0].mxu0
        %v834 = vadd.f32 %v565, %v833
        %v835 = vpop.f32.mrb[0].mxu0
        %v836 = vpop.f32.mrb[0].mxu0
        %v837 = vadd.f32 %v565, %v836
        %v838 = vpop.f32.mrb[0].mxu0
        %839 = vdwg.mxu0
        %v840 = vmax.f32 %v778, 0.0
        %v841 = vmax.f32 %v781, 0.0
        %v842 = vmax.f32 %v786, 0.0
        %v843 = vmax.f32 %v789, 0.0
        %v844 = vmax.f32 %v794, 0.0
        %v845 = vmax.f32 %v797, 0.0
        %v846 = vmax.f32 %v802, 0.0
        %v847 = vmax.f32 %v805, 0.0
        %v848 = vmax.f32 %v810, 0.0
        %v849 = vmax.f32 %v813, 0.0
        %v850 = vmax.f32 %v818, 0.0
        %v851 = vmax.f32 %v821, 0.0
        %v852 = vmax.f32 %v826, 0.0
        %v853 = vmax.f32 %v829, 0.0
        %v854 = vmax.f32 %v834, 0.0
        %v855 = vmax.f32 %v837, 0.0
        %v856 = vpack.c.bf16 %v841, %v840
        %v857 = vpack.c.bf16 %v843, %v842
        %v858 = vpack.c.bf16 %v845, %v844
        %v859 = vpack.c.bf16 %v847, %v846
        %v860 = vpack.c.bf16 %v849, %v848
        %v861 = vpack.c.bf16 %v851, %v850
        %v862 = vpack.c.bf16 %v853, %v852
        %v863 = vpack.c.bf16 %v855, %v854
        %v864 = vld [vmem:[#allocation2] sm:$0xf]
        %v865 = vld [vmem:[#allocation2 + $0x4] sm:$0xf]
        %v866 = vld [vmem:[#allocation2 + $0x8] sm:$0xf]
        %v867 = vld [vmem:[#allocation2 + $0xc] sm:$0xf]
        %v868 = vld [vmem:[#allocation2 + $0x10] sm:$0xf]
        %v869 = vld [vmem:[#allocation2 + $0x14] sm:$0xf]
        %v870 = vld [vmem:[#allocation2 + $0x18] sm:$0xf]
        %v871 = vld [vmem:[#allocation2 + $0x1c] sm:$0xf]
        %v872 = vld [vmem:[#allocation2 + $0x20] sm:$0xf]
        %v873 = vld [vmem:[#allocation2 + $0x24] sm:$0xf]
        %v874 = vld [vmem:[#allocation2 + $0x28] sm:$0xf]
        %v875 = vld [vmem:[#allocation2 + $0x2c] sm:$0xf]
        %v876 = vld [vmem:[#allocation2 + $0x30] sm:$0xf]
        %v877 = vld [vmem:[#allocation2 + $0x34] sm:$0xf]
        %v878 = vld [vmem:[#allocation2 + $0x38] sm:$0xf]
        %v879 = vld [vmem:[#allocation2 + $0x3c] sm:$0xf]
        %v880 = vld [vmem:[%s5] sm:$0x1]
        %v882 = vlaneseq
        %v883 = vshrl.u32 %v882, 7
        %v884 = vsub.s32 0, %v883
        %v885 = vrot.slane %v880, %v884
        %v903 = vunpack.c.l.b16 %v864
        %v904 = vunpack.c.l.b16 %v865
        %v905 = vunpack.c.l.b16 %v866
        %v906 = vunpack.c.l.b16 %v867
        %v907 = vunpack.c.l.b16 %v868
        %v908 = vunpack.c.l.b16 %v869
        %v909 = vunpack.c.l.b16 %v870
        %v910 = vunpack.c.l.b16 %v871
        %v911 = vunpack.c.l.b16 %v872
        %v912 = vunpack.c.l.b16 %v873
        %v913 = vunpack.c.l.b16 %v874
        %v914 = vunpack.c.l.b16 %v875
        %v915 = vunpack.c.l.b16 %v876
        %v916 = vunpack.c.l.b16 %v877
        %v917 = vunpack.c.l.b16 %v878
        %v918 = vunpack.c.l.b16 %v879
        %v919 = vpack.c.b16 %v904, %v903
        %v920 = vpack.c.b16 %v906, %v905
        %v921 = vpack.c.b16 %v908, %v907
        %v922 = vpack.c.b16 %v910, %v909
        %v923 = vpack.c.b16 %v912, %v911
        %v924 = vpack.c.b16 %v914, %v913
        %v925 = vpack.c.b16 %v916, %v915
        %v926 = vpack.c.b16 %v918, %v917
        %935 = vmatprep.subr.bf16.mxu0 0
        %936 = vmatpush1.bf16.msra.mxu0 %v919
        %937 = vmatprep.subr.bf16.mxu0 0
        %938 = vmatpush1.bf16.msra.mxu0 %v920
        %939 = vmatprep.subr.bf16.mxu0 0
        %940 = vmatpush1.bf16.msra.mxu0 %v921
        %941 = vmatprep.subr.bf16.mxu0 0
        %942 = vmatpush1.bf16.msra.mxu0 %v922
        %943 = vmatprep.subr.bf16.mxu0 0
        %944 = vmatpush1.bf16.msra.mxu0 %v923
        %945 = vmatprep.subr.bf16.mxu0 0
        %946 = vmatpush1.bf16.msra.mxu0 %v924
        %947 = vmatprep.subr.bf16.mxu0 0
        %948 = vmatpush1.bf16.msra.mxu0 %v925
        %949 = vmatprep.subr.bf16.mxu0 0
        %950 = vmatpush1.bf16.msra.mxu0 %v926
        %951 = vmatprep.subr.bf16.mxu0 0
        %952 = vmatpush1.bf16.msra.mxu0 0
        %953 = vmatprep.subr.bf16.mxu0 0
        %954 = vmatpush1.bf16.msra.mxu0 0
        %955 = vmatprep.subr.bf16.mxu0 0
        %956 = vmatpush1.bf16.msra.mxu0 0
        %957 = vmatprep.subr.bf16.mxu0 0
        %958 = vmatpush1.bf16.msra.mxu0 0
        %959 = vmatprep.subr.bf16.mxu0 0
        %960 = vmatpush1.bf16.msra.mxu0 0
        %961 = vmatprep.subr.bf16.mxu0 0
        %962 = vmatpush1.bf16.msra.mxu0 0
        %963 = vmatprep.subr.bf16.mxu0 0
        %964 = vmatpush1.bf16.msra.mxu0 0
        %965 = vmatprep.subr.bf16.mxu0 0
        %966 = vmatpush1.bf16.msra.mxu0 0
        %967 = vmatprep.mubr.bf16.mxu0 0
        %968 = vmatmul.mubr.bf16.gmra.mrb[0].mxu0 %v856
        %v969 = vpop.f32.mrb[0].mxu0
        %v970 = vadd.f32 %v885, %v969
        %v971 = vpop.f32.mrb[0].mxu0
        %v972 = vpop.f32.mrb[0].mxu0
        %v973 = vadd.f32 %v885, %v972
        %v974 = vpop.f32.mrb[0].mxu0
        %975 = vmatprep.mubr.bf16.mxu0 0
        %976 = vmatmul.mubr.bf16.gmra.mrb[0].mxu0 %v857
        %v977 = vpop.f32.mrb[0].mxu0
        %v978 = vadd.f32 %v885, %v977
        %v979 = vpop.f32.mrb[0].mxu0
        %v980 = vpop.f32.mrb[0].mxu0
        %v981 = vadd.f32 %v885, %v980
        %v982 = vpop.f32.mrb[0].mxu0
        %983 = vmatprep.mubr.bf16.mxu0 0
        %984 = vmatmul.mubr.bf16.gmra.mrb[0].mxu0 %v858
        %v985 = vpop.f32.mrb[0].mxu0
        %v986 = vadd.f32 %v885, %v985
        %v987 = vpop.f32.mrb[0].mxu0
        %v988 = vpop.f32.mrb[0].mxu0
        %v989 = vadd.f32 %v885, %v988
        %v990 = vpop.f32.mrb[0].mxu0
        %991 = vmatprep.mubr.bf16.mxu0 0
        %992 = vmatmul.mubr.bf16.gmra.mrb[0].mxu0 %v859
        %v993 = vpop.f32.mrb[0].mxu0
        %v994 = vadd.f32 %v885, %v993
        %v995 = vpop.f32.mrb[0].mxu0
        %v996 = vpop.f32.mrb[0].mxu0
        %v997 = vadd.f32 %v885, %v996
        %v998 = vpop.f32.mrb[0].mxu0
        %999 = vmatprep.mubr.bf16.mxu0 0
        %1000 = vmatmul.mubr.bf16.gmra.mrb[0].mxu0 %v860
        %v1001 = vpop.f32.mrb[0].mxu0
        %v1002 = vadd.f32 %v885, %v1001
        %v1003 = vpop.f32.mrb[0].mxu0
        %v1004 = vpop.f32.mrb[0].mxu0
        %v1005 = vadd.f32 %v885, %v1004
        %v1006 = vpop.f32.mrb[0].mxu0
        %1007 = vmatprep.mubr.bf16.mxu0 0
        %1008 = vmatmul.mubr.bf16.gmra.mrb[0].mxu0 %v861
        %v1009 = vpop.f32.mrb[0].mxu0
        %v1010 = vadd.f32 %v885, %v1009
        %v1011 = vpop.f32.mrb[0].mxu0
        %v1012 = vpop.f32.mrb[0].mxu0
        %v1013 = vadd.f32 %v885, %v1012
        %v1014 = vpop.f32.mrb[0].mxu0
        %1015 = vmatprep.mubr.bf16.mxu0 0
        %1016 = vmatmul.mubr.bf16.gmra.mrb[0].mxu0 %v862
        %v1017 = vpop.f32.mrb[0].mxu0
        %v1018 = vadd.f32 %v885, %v1017
        %v1019 = vpop.f32.mrb[0].mxu0
        %v1020 = vpop.f32.mrb[0].mxu0
        %v1021 = vadd.f32 %v885, %v1020
        %v1022 = vpop.f32.mrb[0].mxu0
        %1023 = vmatprep.mubr.bf16.mxu0 0
        %1024 = vmatmul.mubr.bf16.gmra.mrb[0].mxu0 %v863
        %v1025 = vpop.f32.mrb[0].mxu0
        %v1026 = vadd.f32 %v885, %v1025
        %v1027 = vpop.f32.mrb[0].mxu0
        %v1028 = vpop.f32.mrb[0].mxu0
        %v1029 = vadd.f32 %v885, %v1028
        %v1030 = vpop.f32.mrb[0].mxu0
        %1031 = vdwg.mxu0
        %v1032 = vld [vmem:[%s496] sm:$0xff]
        %v1033 = vld [vmem:[%s496 + $0x8] sm:$0xff]
        %v1034 = vld [vmem:[%s496 + $0x10] sm:$0xff]
        %v1035 = vld [vmem:[%s496 + $0x18] sm:$0xff]
        %v1036 = vld [vmem:[%s496 + $0x20] sm:$0xff]
        %v1037 = vld [vmem:[%s496 + $0x28] sm:$0xff]
        %v1038 = vld [vmem:[%s496 + $0x30] sm:$0xff]
        %v1039 = vld [vmem:[%s496 + $0x38] sm:$0xff]
        %v1040 = vld [vmem:[%s496 + $0x40] sm:$0xff]
        %v1041 = vld [vmem:[%s496 + $0x48] sm:$0xff]
        %v1042 = vld [vmem:[%s496 + $0x50] sm:$0xff]
        %v1043 = vld [vmem:[%s496 + $0x58] sm:$0xff]
        %v1044 = vld [vmem:[%s496 + $0x60] sm:$0xff]
        %v1045 = vld [vmem:[%s496 + $0x68] sm:$0xff]
        %v1046 = vld [vmem:[%s496 + $0x70] sm:$0xff]
        %v1047 = vld [vmem:[%s496 + $0x78] sm:$0xff]
        %v1048 = vmul.f32 %v970, 0.5
        %v1049 = vmul.f32 %v973, 0.5
        %v1050 = vmul.f32 %v978, 0.5
        %v1051 = vmul.f32 %v981, 0.5
        %v1052 = vmul.f32 %v986, 0.5
        %v1053 = vmul.f32 %v989, 0.5
        %v1054 = vmul.f32 %v994, 0.5
        %v1055 = vmul.f32 %v997, 0.5
        %v1056 = vmul.f32 %v1002, 0.5
        %v1057 = vmul.f32 %v1005, 0.5
        %v1058 = vmul.f32 %v1010, 0.5
        %v1059 = vmul.f32 %v1013, 0.5
        %v1060 = vmul.f32 %v1018, 0.5
        %v1061 = vmul.f32 %v1021, 0.5
        %v1062 = vmul.f32 %v1026, 0.5
        %v1063 = vmul.f32 %v1029, 0.5
        %v1064 = vmul.f32 %v1048, 1.442695
        %v1065 = vpow.pop %v1064
        %v1066 = vmul.f32 %v1049, 1.442695
        %v1067 = vpow.pop %v1066
        %v1068 = vmul.f32 %v1050, 1.442695
        %v1069 = vpow.pop %v1068
        %v1070 = vmul.f32 %v1051, 1.442695
        %v1071 = vpow.pop %v1070
        %v1072 = vmul.f32 %v1052, 1.442695
        %v1073 = vpow.pop %v1072
        %v1074 = vmul.f32 %v1053, 1.442695
        %v1075 = vpow.pop %v1074
        %v1076 = vmul.f32 %v1054, 1.442695
        %v1077 = vpow.pop %v1076
        %v1078 = vmul.f32 %v1055, 1.442695
        %v1079 = vpow.pop %v1078
        %v1080 = vmul.f32 %v1056, 1.442695
        %v1081 = vpow.pop %v1080
        %v1082 = vmul.f32 %v1057, 1.442695
        %v1083 = vpow.pop %v1082
        %v1084 = vmul.f32 %v1058, 1.442695
        %v1085 = vpow.pop %v1084
        %v1086 = vmul.f32 %v1059, 1.442695
        %v1087 = vpow.pop %v1086
        %v1088 = vmul.f32 %v1060, 1.442695
        %v1089 = vpow.pop %v1088
        %v1090 = vmul.f32 %v1061, 1.442695
        %v1091 = vpow.pop %v1090
        %v1092 = vmul.f32 %v1062, 1.442695
        %v1093 = vpow.pop %v1092
        %v1094 = vmul.f32 %v1063, 1.442695
        %v1095 = vpow.pop %v1094
        %1112 = vrot.lane.b32.xlu0 %v1065, 64
        %v1113 = vpop.permute.xlu0 %1112
        %1114 = vrot.lane.b32.xlu0 %v1067, 64
        %v1115 = vpop.permute.xlu0 %1114
        %1116 = vrot.lane.b32.xlu0 %v1069, 64
        %v1117 = vpop.permute.xlu0 %1116
        %1118 = vrot.lane.b32.xlu0 %v1071, 64
        %v1119 = vpop.permute.xlu0 %1118
        %1120 = vrot.lane.b32.xlu0 %v1073, 64
        %v1121 = vpop.permute.xlu0 %1120
        %1122 = vrot.lane.b32.xlu0 %v1075, 64
        %v1123 = vpop.permute.xlu0 %1122
        %1124 = vrot.lane.b32.xlu0 %v1077, 64
        %v1125 = vpop.permute.xlu0 %1124
        %1126 = vrot.lane.b32.xlu0 %v1079, 64
        %v1127 = vpop.permute.xlu0 %1126
        %1128 = vrot.lane.b32.xlu0 %v1081, 64
        %v1129 = vpop.permute.xlu0 %1128
        %1130 = vrot.lane.b32.xlu0 %v1083, 64
        %v1131 = vpop.permute.xlu0 %1130
        %1132 = vrot.lane.b32.xlu0 %v1085, 64
        %v1133 = vpop.permute.xlu0 %1132
        %1134 = vrot.lane.b32.xlu0 %v1087, 64
        %v1135 = vpop.permute.xlu0 %1134
        %1136 = vrot.lane.b32.xlu0 %v1089, 64
        %v1137 = vpop.permute.xlu0 %1136
        %1138 = vrot.lane.b32.xlu0 %v1091, 64
        %v1139 = vpop.permute.xlu0 %1138
        %1140 = vrot.lane.b32.xlu0 %v1093, 64
        %v1141 = vpop.permute.xlu0 %1140
        %1142 = vrot.lane.b32.xlu0 %v1095, 64
        %v1143 = vpop.permute.xlu0 %1142
        %v1160 = vmul.f32 %v1032, %v1113
        %v1161 = vmul.f32 %v1033, %v1115
        %v1162 = vmul.f32 %v1034, %v1117
        %v1163 = vmul.f32 %v1035, %v1119
        %v1164 = vmul.f32 %v1036, %v1121
        %v1165 = vmul.f32 %v1037, %v1123
        %v1166 = vmul.f32 %v1038, %v1125
        %v1167 = vmul.f32 %v1039, %v1127
        %v1168 = vmul.f32 %v1040, %v1129
        %v1169 = vmul.f32 %v1041, %v1131
        %v1170 = vmul.f32 %v1042, %v1133
        %v1171 = vmul.f32 %v1043, %v1135
        %v1172 = vmul.f32 %v1044, %v1137
        %v1173 = vmul.f32 %v1045, %v1139
        %v1174 = vmul.f32 %v1046, %v1141
        %v1175 = vmul.f32 %v1047, %v1143
        %v1176 = vadd.f32 %v1160, %v970
        %v1177 = vadd.f32 %v1161, %v973
        %v1178 = vadd.f32 %v1162, %v978
        %v1179 = vadd.f32 %v1163, %v981
        %v1180 = vadd.f32 %v1164, %v986
        %v1181 = vadd.f32 %v1165, %v989
        %v1182 = vadd.f32 %v1166, %v994
        %v1183 = vadd.f32 %v1167, %v997
        %v1184 = vadd.f32 %v1168, %v1002
        %v1185 = vadd.f32 %v1169, %v1005
        %v1186 = vadd.f32 %v1170, %v1010
        %v1187 = vadd.f32 %v1171, %v1013
        %v1188 = vadd.f32 %v1172, %v1018
        %v1189 = vadd.f32 %v1173, %v1021
        %v1190 = vadd.f32 %v1174, %v1026
        %v1191 = vadd.f32 %v1175, %v1029
        %v1192 = vpack.c.bf16 %v1177, %v1176
        %v1193 = vpack.c.bf16 %v1179, %v1178
        %v1194 = vpack.c.bf16 %v1181, %v1180
        %v1195 = vpack.c.bf16 %v1183, %v1182
        %v1196 = vpack.c.bf16 %v1185, %v1184
        %v1197 = vpack.c.bf16 %v1187, %v1186
        %v1198 = vpack.c.bf16 %v1189, %v1188
        %v1199 = vpack.c.bf16 %v1191, %v1190
        %v1200 = vld [vmem:[#allocation5] sm:$0xf]
        %v1201 = vld [vmem:[#allocation5 + $0x4] sm:$0xf]
        %v1202 = vld [vmem:[#allocation5 + $0x8] sm:$0xf]
        %v1203 = vld [vmem:[#allocation5 + $0xc] sm:$0xf]
        %v1204 = vld [vmem:[#allocation5 + $0x10] sm:$0xf]
        %v1205 = vld [vmem:[#allocation5 + $0x14] sm:$0xf]
        %v1206 = vld [vmem:[#allocation5 + $0x18] sm:$0xf]
        %v1207 = vld [vmem:[#allocation5 + $0x1c] sm:$0xf]
        %v1208 = vld [vmem:[%s7] sm:$0x1]
        %v1210 = vlaneseq
        %v1211 = vshrl.u32 %v1210, 7
        %v1212 = vsub.s32 0, %v1211
        %v1213 = vrot.slane %v1208, %v1212
        %v1223 = vunpack.c.l.b16 %v1200
        %v1224 = vunpack.c.l.b16 %v1201
        %v1225 = vunpack.c.l.b16 %v1202
        %v1226 = vunpack.c.l.b16 %v1203
        %v1227 = vunpack.c.l.b16 %v1204
        %v1228 = vunpack.c.l.b16 %v1205
        %v1229 = vunpack.c.l.b16 %v1206
        %v1230 = vunpack.c.l.b16 %v1207
        %v1231 = vpack.c.b16 %v1224, %v1223
        %v1232 = vpack.c.b16 %v1226, %v1225
        %v1233 = vpack.c.b16 %v1228, %v1227
        %v1234 = vpack.c.b16 %v1230, %v1229
        %vm1239 = vcmask 523264
        %v1241 = vsel %vm1239, %v1192, 0
        %v1244 = vsel %vm1239, %v1193, 0
        %v1247 = vsel %vm1239, %v1194, 0
        %v1250 = vsel %vm1239, %v1195, 0
        %v1253 = vsel %vm1239, %v1196, 0
        %v1256 = vsel %vm1239, %v1197, 0
        %v1259 = vsel %vm1239, %v1198, 0
        %v1262 = vsel %vm1239, %v1199, 0
        %1264 = vmatprep.subr.bf16.mxu0 0
        %1265 = vmatpush1.bf16.msra.mxu0 %v1231
        %1266 = vmatprep.subr.bf16.mxu0 0
        %1267 = vmatpush1.bf16.msra.mxu0 %v1232
        %1268 = vmatprep.subr.bf16.mxu0 0
        %1269 = vmatpush1.bf16.msra.mxu0 %v1233
        %1270 = vmatprep.subr.bf16.mxu0 0
        %1271 = vmatpush1.bf16.msra.mxu0 %v1234
        %1272 = vmatprep.subr.bf16.mxu0 0
        %1273 = vmatpush1.bf16.msra.mxu0 0
        %1274 = vmatprep.subr.bf16.mxu0 0
        %1275 = vmatpush1.bf16.msra.mxu0 0
        %1276 = vmatprep.subr.bf16.mxu0 0
        %1277 = vmatpush1.bf16.msra.mxu0 0
        %1278 = vmatprep.subr.bf16.mxu0 0
        %1279 = vmatpush1.bf16.msra.mxu0 0
        %1280 = vmatprep.subr.bf16.mxu0 0
        %1281 = vmatpush1.bf16.msra.mxu0 0
        %1282 = vmatprep.subr.bf16.mxu0 0
        %1283 = vmatpush1.bf16.msra.mxu0 0
        %1284 = vmatprep.subr.bf16.mxu0 0
        %1285 = vmatpush1.bf16.msra.mxu0 0
        %1286 = vmatprep.subr.bf16.mxu0 0
        %1287 = vmatpush1.bf16.msra.mxu0 0
        %1288 = vmatprep.subr.bf16.mxu0 0
        %1289 = vmatpush1.bf16.msra.mxu0 0
        %1290 = vmatprep.subr.bf16.mxu0 0
        %1291 = vmatpush1.bf16.msra.mxu0 0
        %1292 = vmatprep.subr.bf16.mxu0 0
        %1293 = vmatpush1.bf16.msra.mxu0 0
        %1294 = vmatprep.subr.bf16.mxu0 0
        %1295 = vmatpush1.bf16.msra.mxu0 0
        %1296 = vmatprep.mubr.bf16.mxu0 0
        %1297 = vmatmul.mubr.bf16.gmra.mrb[0].mxu0 %v1241
        %v1298 = vpop.f32.mrb[0].mxu0
        %v1299 = vadd.f32 %v1213, %v1298
        %v1300 = vpop.f32.mrb[0].mxu0
        %v1301 = vpop.f32.mrb[0].mxu0
        %v1302 = vadd.f32 %v1213, %v1301
        %v1303 = vpop.f32.mrb[0].mxu0
        %1304 = vmatprep.mubr.bf16.mxu0 0
        %1305 = vmatmul.mubr.bf16.gmra.mrb[0].mxu0 %v1244
        %v1306 = vpop.f32.mrb[0].mxu0
        %v1307 = vadd.f32 %v1213, %v1306
        %v1308 = vpop.f32.mrb[0].mxu0
        %v1309 = vpop.f32.mrb[0].mxu0
        %v1310 = vadd.f32 %v1213, %v1309
        %v1311 = vpop.f32.mrb[0].mxu0
        %1312 = vmatprep.mubr.bf16.mxu0 0
        %1313 = vmatmul.mubr.bf16.gmra.mrb[0].mxu0 %v1247
        %v1314 = vpop.f32.mrb[0].mxu0
        %v1315 = vadd.f32 %v1213, %v1314
        %v1316 = vpop.f32.mrb[0].mxu0
        %v1317 = vpop.f32.mrb[0].mxu0
        %v1318 = vadd.f32 %v1213, %v1317
        %v1319 = vpop.f32.mrb[0].mxu0
        %1320 = vmatprep.mubr.bf16.mxu0 0
        %1321 = vmatmul.mubr.bf16.gmra.mrb[0].mxu0 %v1250
        %v1322 = vpop.f32.mrb[0].mxu0
        %v1323 = vadd.f32 %v1213, %v1322
        %v1324 = vpop.f32.mrb[0].mxu0
        %v1325 = vpop.f32.mrb[0].mxu0
        %v1326 = vadd.f32 %v1213, %v1325
        %v1327 = vpop.f32.mrb[0].mxu0
        %1328 = vmatprep.mubr.bf16.mxu0 0
        %1329 = vmatmul.mubr.bf16.gmra.mrb[0].mxu0 %v1253
        %v1330 = vpop.f32.mrb[0].mxu0
        %v1331 = vadd.f32 %v1213, %v1330
        %v1332 = vpop.f32.mrb[0].mxu0
        %v1333 = vpop.f32.mrb[0].mxu0
        %v1334 = vadd.f32 %v1213, %v1333
        %v1335 = vpop.f32.mrb[0].mxu0
        %1336 = vmatprep.mubr.bf16.mxu0 0
        %1337 = vmatmul.mubr.bf16.gmra.mrb[0].mxu0 %v1256
        %v1338 = vpop.f32.mrb[0].mxu0
        %v1339 = vadd.f32 %v1213, %v1338
        %v1340 = vpop.f32.mrb[0].mxu0
        %v1341 = vpop.f32.mrb[0].mxu0
        %v1342 = vadd.f32 %v1213, %v1341
        %v1343 = vpop.f32.mrb[0].mxu0
        %1344 = vmatprep.mubr.bf16.mxu0 0
        %1345 = vmatmul.mubr.bf16.gmra.mrb[0].mxu0 %v1259
        %v1346 = vpop.f32.mrb[0].mxu0
        %v1347 = vadd.f32 %v1213, %v1346
        %v1348 = vpop.f32.mrb[0].mxu0
        %v1349 = vpop.f32.mrb[0].mxu0
        %v1350 = vadd.f32 %v1213, %v1349
        %v1351 = vpop.f32.mrb[0].mxu0
        %1352 = vmatprep.mubr.bf16.mxu0 0
        %1353 = vmatmul.mubr.bf16.gmra.mrb[0].mxu0 %v1262
        %v1354 = vpop.f32.mrb[0].mxu0
        %v1355 = vadd.f32 %v1213, %v1354
        %v1356 = vpop.f32.mrb[0].mxu0
        %v1357 = vpop.f32.mrb[0].mxu0
        %v1358 = vadd.f32 %v1213, %v1357
        %v1359 = vpop.f32.mrb[0].mxu0
        %1360 = vdwg.mxu0
        %v1361 = vmax.f32 %v1299, 0.0
        %v1362 = vmax.f32 %v1302, 0.0
        %v1363 = vmax.f32 %v1307, 0.0
        %v1364 = vmax.f32 %v1310, 0.0
        %v1365 = vmax.f32 %v1315, 0.0
        %v1366 = vmax.f32 %v1318, 0.0
        %v1367 = vmax.f32 %v1323, 0.0
        %v1368 = vmax.f32 %v1326, 0.0
        %v1369 = vmax.f32 %v1331, 0.0
        %v1370 = vmax.f32 %v1334, 0.0
        %v1371 = vmax.f32 %v1339, 0.0
        %v1372 = vmax.f32 %v1342, 0.0
        %v1373 = vmax.f32 %v1347, 0.0
        %v1374 = vmax.f32 %v1350, 0.0
        %v1375 = vmax.f32 %v1355, 0.0
        %v1376 = vmax.f32 %v1358, 0.0
        %v1377 = vpack.c.bf16 %v1362, %v1361
        %v1378 = vpack.c.bf16 %v1364, %v1363
        %v1379 = vpack.c.bf16 %v1366, %v1365
        %v1380 = vpack.c.bf16 %v1368, %v1367
        %v1381 = vpack.c.bf16 %v1370, %v1369
        %v1382 = vpack.c.bf16 %v1372, %v1371
        %v1383 = vpack.c.bf16 %v1374, %v1373
        %v1384 = vpack.c.bf16 %v1376, %v1375
        %v1385 = vld [vmem:[#allocation7] sm:$0xff]
        %v1386 = vld [vmem:[#allocation7 + $0x8] sm:$0xff]
        %v1387 = vld [vmem:[#allocation7 + $0x10] sm:$0xff]
        %v1388 = vld [vmem:[#allocation7 + $0x18] sm:$0xff]
        %v1389 = vld [vmem:[#allocation7 + $0x20] sm:$0xff]
        %v1390 = vld [vmem:[#allocation7 + $0x28] sm:$0xff]
        %v1391 = vld [vmem:[#allocation7 + $0x30] sm:$0xff]
        %v1392 = vld [vmem:[#allocation7 + $0x38] sm:$0xff]
        %v1393 = vld [vmem:[#allocation7 + $0x40] sm:$0xff]
        %v1394 = vld [vmem:[#allocation7 + $0x48] sm:$0xff]
        %v1395 = vld [vmem:[#allocation7 + $0x50] sm:$0xff]
        %v1396 = vld [vmem:[#allocation7 + $0x58] sm:$0xff]
        %v1397 = vld [vmem:[#allocation7 + $0x60] sm:$0xff]
        %v1398 = vld [vmem:[#allocation7 + $0x68] sm:$0xff]
        %v1399 = vld [vmem:[#allocation7 + $0x70] sm:$0xff]
        %v1400 = vld [vmem:[#allocation7 + $0x78] sm:$0xff]
        %v1401 = vld [vmem:[%s9] sm:$0x3]
        %v1403 = vlaneseq
        %v1404 = vshrl.u32 %v1403, 7
        %v1405 = vsub.s32 0, %v1404
        %v1406 = vrot.slane %v1401, %v1405
        %v1407 = vlaneseq
        %v1408 = vshrl.u32 %v1407, 7
        %v1409 = vsub.s32 1, %v1408
        %v1410 = vrot.slane %v1401, %v1409
        %v1429 = vunpack.c.l.b16 %v1385
        %v1430 = vunpack.c.h.b16 %v1385
        %v1431 = vunpack.c.l.b16 %v1386
        %v1432 = vunpack.c.h.b16 %v1386
        %v1433 = vunpack.c.l.b16 %v1387
        %v1434 = vunpack.c.h.b16 %v1387
        %v1435 = vunpack.c.l.b16 %v1388
        %v1436 = vunpack.c.h.b16 %v1388
        %v1437 = vunpack.c.l.b16 %v1389
        %v1438 = vunpack.c.h.b16 %v1389
        %v1439 = vunpack.c.l.b16 %v1390
        %v1440 = vunpack.c.h.b16 %v1390
        %v1441 = vunpack.c.l.b16 %v1391
        %v1442 = vunpack.c.h.b16 %v1391
        %v1443 = vunpack.c.l.b16 %v1392
        %v1444 = vunpack.c.h.b16 %v1392
        %v1445 = vunpack.c.l.b16 %v1393
        %v1446 = vunpack.c.h.b16 %v1393
        %v1447 = vunpack.c.l.b16 %v1394
        %v1448 = vunpack.c.h.b16 %v1394
        %v1449 = vunpack.c.l.b16 %v1395
        %v1450 = vunpack.c.h.b16 %v1395
        %v1451 = vunpack.c.l.b16 %v1396
        %v1452 = vunpack.c.h.b16 %v1396
        %v1453 = vunpack.c.l.b16 %v1397
        %v1454 = vunpack.c.h.b16 %v1397
        %v1455 = vunpack.c.l.b16 %v1398
        %v1456 = vunpack.c.h.b16 %v1398
        %v1457 = vunpack.c.l.b16 %v1399
        %v1458 = vunpack.c.h.b16 %v1399
        %v1459 = vunpack.c.l.b16 %v1400
        %v1460 = vunpack.c.h.b16 %v1400
        %v1461 = vpack.c.b16 %v1431, %v1429
        %v1462 = vpack.c.b16 %v1432, %v1430
        %v1463 = vpack.c.b16 %v1435, %v1433
        %v1464 = vpack.c.b16 %v1436, %v1434
        %v1465 = vpack.c.b16 %v1439, %v1437
        %v1466 = vpack.c.b16 %v1440, %v1438
        %v1467 = vpack.c.b16 %v1443, %v1441
        %v1468 = vpack.c.b16 %v1444, %v1442
        %v1469 = vpack.c.b16 %v1447, %v1445
        %v1470 = vpack.c.b16 %v1448, %v1446
        %v1471 = vpack.c.b16 %v1451, %v1449
        %v1472 = vpack.c.b16 %v1452, %v1450
        %v1473 = vpack.c.b16 %v1455, %v1453
        %v1474 = vpack.c.b16 %v1456, %v1454
        %v1475 = vpack.c.b16 %v1459, %v1457
        %v1476 = vpack.c.b16 %v1460, %v1458
        %1493 = vmatprep.subr.bf16.mxu0 %v1462
        %1494 = vmatpush1.bf16.msra.mxu0 %v1461
        %1495 = vmatprep.subr.bf16.mxu0 %v1464
        %1496 = vmatpush1.bf16.msra.mxu0 %v1463
        %1497 = vmatprep.subr.bf16.mxu0 %v1466
        %1498 = vmatpush1.bf16.msra.mxu0 %v1465
        %1499 = vmatprep.subr.bf16.mxu0 %v1468
        %1500 = vmatpush1.bf16.msra.mxu0 %v1467
        %1501 = vmatprep.subr.bf16.mxu0 %v1470
        %1502 = vmatpush1.bf16.msra.mxu0 %v1469
        %1503 = vmatprep.subr.bf16.mxu0 %v1472
        %1504 = vmatpush1.bf16.msra.mxu0 %v1471
        %1505 = vmatprep.subr.bf16.mxu0 %v1474
        %1506 = vmatpush1.bf16.msra.mxu0 %v1473
        %1507 = vmatprep.subr.bf16.mxu0 %v1476
        %1508 = vmatpush1.bf16.msra.mxu0 %v1475
        %1509 = vmatprep.subr.bf16.mxu0 0
        %1510 = vmatpush1.bf16.msra.mxu0 0
        %1511 = vmatprep.subr.bf16.mxu0 0
        %1512 = vmatpush1.bf16.msra.mxu0 0
        %1513 = vmatprep.subr.bf16.mxu0 0
        %1514 = vmatpush1.bf16.msra.mxu0 0
        %1515 = vmatprep.subr.bf16.mxu0 0
        %1516 = vmatpush1.bf16.msra.mxu0 0
        %1517 = vmatprep.subr.bf16.mxu0 0
        %1518 = vmatpush1.bf16.msra.mxu0 0
        %1519 = vmatprep.subr.bf16.mxu0 0
        %1520 = vmatpush1.bf16.msra.mxu0 0
        %1521 = vmatprep.subr.bf16.mxu0 0
        %1522 = vmatpush1.bf16.msra.mxu0 0
        %1523 = vmatprep.subr.bf16.mxu0 0
        %1524 = vmatpush1.bf16.msra.mxu0 0
        %1525 = vmatprep.mubr.bf16.mxu0 0
        %1526 = vmatmul.mubr.bf16.gmra.mrb[0].mxu0 %v1377
        %v1527 = vpop.f32.mrb[0].mxu0
        %v1528 = vadd.f32 %v1406, %v1527
        %v1529 = vpop.f32.mrb[0].mxu0
        %v1530 = vadd.f32 %v1410, %v1529
        %v1531 = vpop.f32.mrb[0].mxu0
        %v1532 = vadd.f32 %v1406, %v1531
        %v1533 = vpop.f32.mrb[0].mxu0
        %v1534 = vadd.f32 %v1410, %v1533
        %1535 = vmatprep.mubr.bf16.mxu0 0
        %1536 = vmatmul.mubr.bf16.gmra.mrb[0].mxu0 %v1378
        %v1537 = vpop.f32.mrb[0].mxu0
        %v1538 = vadd.f32 %v1406, %v1537
        %v1539 = vpop.f32.mrb[0].mxu0
        %v1540 = vadd.f32 %v1410, %v1539
        %v1541 = vpop.f32.mrb[0].mxu0
        %v1542 = vadd.f32 %v1406, %v1541
        %v1543 = vpop.f32.mrb[0].mxu0
        %v1544 = vadd.f32 %v1410, %v1543
        %1545 = vmatprep.mubr.bf16.mxu0 0
        %1546 = vmatmul.mubr.bf16.gmra.mrb[0].mxu0 %v1379
        %v1547 = vpop.f32.mrb[0].mxu0
        %v1548 = vadd.f32 %v1406, %v1547
        %v1549 = vpop.f32.mrb[0].mxu0
        %v1550 = vadd.f32 %v1410, %v1549
        %v1551 = vpop.f32.mrb[0].mxu0
        %v1552 = vadd.f32 %v1406, %v1551
        %v1553 = vpop.f32.mrb[0].mxu0
        %v1554 = vadd.f32 %v1410, %v1553
        %1555 = vmatprep.mubr.bf16.mxu0 0
        %1556 = vmatmul.mubr.bf16.gmra.mrb[0].mxu0 %v1380
        %v1557 = vpop.f32.mrb[0].mxu0
        %v1558 = vadd.f32 %v1406, %v1557
        %v1559 = vpop.f32.mrb[0].mxu0
        %v1560 = vadd.f32 %v1410, %v1559
        %v1561 = vpop.f32.mrb[0].mxu0
        %v1562 = vadd.f32 %v1406, %v1561
        %v1563 = vpop.f32.mrb[0].mxu0
        %v1564 = vadd.f32 %v1410, %v1563
        %1565 = vmatprep.mubr.bf16.mxu0 0
        %1566 = vmatmul.mubr.bf16.gmra.mrb[0].mxu0 %v1381
        %v1567 = vpop.f32.mrb[0].mxu0
        %v1568 = vadd.f32 %v1406, %v1567
        %v1569 = vpop.f32.mrb[0].mxu0
        %v1570 = vadd.f32 %v1410, %v1569
        %v1571 = vpop.f32.mrb[0].mxu0
        %v1572 = vadd.f32 %v1406, %v1571
        %v1573 = vpop.f32.mrb[0].mxu0
        %v1574 = vadd.f32 %v1410, %v1573
        %1575 = vmatprep.mubr.bf16.mxu0 0
        %1576 = vmatmul.mubr.bf16.gmra.mrb[0].mxu0 %v1382
        %v1577 = vpop.f32.mrb[0].mxu0
        %v1578 = vadd.f32 %v1406, %v1577
        %v1579 = vpop.f32.mrb[0].mxu0
        %v1580 = vadd.f32 %v1410, %v1579
        %v1581 = vpop.f32.mrb[0].mxu0
        %v1582 = vadd.f32 %v1406, %v1581
        %v1583 = vpop.f32.mrb[0].mxu0
        %v1584 = vadd.f32 %v1410, %v1583
        %1585 = vmatprep.mubr.bf16.mxu0 0
        %1586 = vmatmul.mubr.bf16.gmra.mrb[0].mxu0 %v1383
        %v1587 = vpop.f32.mrb[0].mxu0
        %v1588 = vadd.f32 %v1406, %v1587
        %v1589 = vpop.f32.mrb[0].mxu0
        %v1590 = vadd.f32 %v1410, %v1589
        %v1591 = vpop.f32.mrb[0].mxu0
        %v1592 = vadd.f32 %v1406, %v1591
        %v1593 = vpop.f32.mrb[0].mxu0
        %v1594 = vadd.f32 %v1410, %v1593
        %1595 = vmatprep.mubr.bf16.mxu0 0
        %1596 = vmatmul.mubr.bf16.gmra.mrb[0].mxu0 %v1384
        %v1597 = vpop.f32.mrb[0].mxu0
        %v1598 = vadd.f32 %v1406, %v1597
        %v1599 = vpop.f32.mrb[0].mxu0
        %v1600 = vadd.f32 %v1410, %v1599
        %v1601 = vpop.f32.mrb[0].mxu0
        %v1602 = vadd.f32 %v1406, %v1601
        %v1603 = vpop.f32.mrb[0].mxu0
        %v1604 = vadd.f32 %v1410, %v1603
        %1605 = vdwg.mxu0
        %v1606 = vpack.c.bf16 %v1532, %v1528
        %v1607 = vpack.c.bf16 %v1534, %v1530
        %v1608 = vpack.c.bf16 %v1542, %v1538
        %v1609 = vpack.c.bf16 %v1544, %v1540
        %v1610 = vpack.c.bf16 %v1552, %v1548
        %v1611 = vpack.c.bf16 %v1554, %v1550
        %v1612 = vpack.c.bf16 %v1562, %v1558
        %v1613 = vpack.c.bf16 %v1564, %v1560
        %v1614 = vpack.c.bf16 %v1572, %v1568
        %v1615 = vpack.c.bf16 %v1574, %v1570
        %v1616 = vpack.c.bf16 %v1582, %v1578
        %v1617 = vpack.c.bf16 %v1584, %v1580
        %v1618 = vpack.c.bf16 %v1592, %v1588
        %v1619 = vpack.c.bf16 %v1594, %v1590
        %v1620 = vpack.c.bf16 %v1602, %v1598
        %v1621 = vpack.c.bf16 %v1604, %v1600
        %v1638 = vunpack.c.l.b16 %v1606
        %v1639 = vunpack.c.l.b16 %v1607
        %v1640 = vunpack.c.h.b16 %v1606
        %v1641 = vunpack.c.h.b16 %v1607
        %v1642 = vunpack.c.l.b16 %v1608
        %v1643 = vunpack.c.l.b16 %v1609
        %v1644 = vunpack.c.h.b16 %v1608
        %v1645 = vunpack.c.h.b16 %v1609
        %v1646 = vunpack.c.l.b16 %v1610
        %v1647 = vunpack.c.l.b16 %v1611
        %v1648 = vunpack.c.h.b16 %v1610
        %v1649 = vunpack.c.h.b16 %v1611
        %v1650 = vunpack.c.l.b16 %v1612
        %v1651 = vunpack.c.l.b16 %v1613
        %v1652 = vunpack.c.h.b16 %v1612
        %v1653 = vunpack.c.h.b16 %v1613
        %v1654 = vunpack.c.l.b16 %v1614
        %v1655 = vunpack.c.l.b16 %v1615
        %v1656 = vunpack.c.h.b16 %v1614
        %v1657 = vunpack.c.h.b16 %v1615
        %v1658 = vunpack.c.l.b16 %v1616
        %v1659 = vunpack.c.l.b16 %v1617
        %v1660 = vunpack.c.h.b16 %v1616
        %v1661 = vunpack.c.h.b16 %v1617
        %v1662 = vunpack.c.l.b16 %v1618
        %v1663 = vunpack.c.l.b16 %v1619
        %v1664 = vunpack.c.h.b16 %v1618
        %v1665 = vunpack.c.h.b16 %v1619
        %v1666 = vunpack.c.l.b16 %v1620
        %v1667 = vunpack.c.l.b16 %v1621
        %v1668 = vunpack.c.h.b16 %v1620
        %v1669 = vunpack.c.h.b16 %v1621
        %v1670 = vpack.c.b16 %v1639, %v1638
        %v1671 = vpack.c.b16 %v1641, %v1640
        %v1672 = vpack.c.b16 %v1643, %v1642
        %v1673 = vpack.c.b16 %v1645, %v1644
        %v1674 = vpack.c.b16 %v1647, %v1646
        %v1675 = vpack.c.b16 %v1649, %v1648
        %v1676 = vpack.c.b16 %v1651, %v1650
        %v1677 = vpack.c.b16 %v1653, %v1652
        %v1678 = vpack.c.b16 %v1655, %v1654
        %v1679 = vpack.c.b16 %v1657, %v1656
        %v1680 = vpack.c.b16 %v1659, %v1658
        %v1681 = vpack.c.b16 %v1661, %v1660
        %v1682 = vpack.c.b16 %v1663, %v1662
        %v1683 = vpack.c.b16 %v1665, %v1664
        %v1684 = vpack.c.b16 %v1667, %v1666
        %v1685 = vpack.c.b16 %v1669, %v1668
        %1702 = vst [vmem:[%s470] sm:$0xff] %v1670
        %1703 = vst [vmem:[%s470 + $0x8] sm:$0xff] %v1671
        %1704 = vst [vmem:[%s470 + $0x10] sm:$0xff] %v1672
        %1705 = vst [vmem:[%s470 + $0x18] sm:$0xff] %v1673
        %1706 = vst [vmem:[%s470 + $0x20] sm:$0xff] %v1674
        %1707 = vst [vmem:[%s470 + $0x28] sm:$0xff] %v1675
        %1708 = vst [vmem:[%s470 + $0x30] sm:$0xff] %v1676
        %1709 = vst [vmem:[%s470 + $0x38] sm:$0xff] %v1677
        %1710 = vst [vmem:[%s470 + $0x40] sm:$0xff] %v1678
        %1711 = vst [vmem:[%s470 + $0x48] sm:$0xff] %v1679
        %1712 = vst [vmem:[%s470 + $0x50] sm:$0xff] %v1680
        %1713 = vst [vmem:[%s470 + $0x58] sm:$0xff] %v1681
        %1714 = vst [vmem:[%s470 + $0x60] sm:$0xff] %v1682
        %1715 = vst [vmem:[%s470 + $0x68] sm:$0xff] %v1683
        %1716 = vst [vmem:[%s470 + $0x70] sm:$0xff] %v1684
        %1717 = vst [vmem:[%s470 + $0x78] sm:$0xff] %v1685
        %1718 = vst.msk [vmem:[%s503] sm:$0xff] %vm1239, %v1176
        %1719 = vst.msk [vmem:[%s503 + $0x8] sm:$0xff] %vm1239, %v1177
        %1720 = vst.msk [vmem:[%s503 + $0x10] sm:$0xff] %vm1239, %v1178
        %1721 = vst.msk [vmem:[%s503 + $0x18] sm:$0xff] %vm1239, %v1179
        %1722 = vst.msk [vmem:[%s503 + $0x20] sm:$0xff] %vm1239, %v1180
        %1723 = vst.msk [vmem:[%s503 + $0x28] sm:$0xff] %vm1239, %v1181
        %1724 = vst.msk [vmem:[%s503 + $0x30] sm:$0xff] %vm1239, %v1182
        %1725 = vst.msk [vmem:[%s503 + $0x38] sm:$0xff] %vm1239, %v1183
        %1726 = vst.msk [vmem:[%s503 + $0x40] sm:$0xff] %vm1239, %v1184
        %1727 = vst.msk [vmem:[%s503 + $0x48] sm:$0xff] %vm1239, %v1185
        %1728 = vst.msk [vmem:[%s503 + $0x50] sm:$0xff] %vm1239, %v1186
        %1729 = vst.msk [vmem:[%s503 + $0x58] sm:$0xff] %vm1239, %v1187
        %1730 = vst.msk [vmem:[%s503 + $0x60] sm:$0xff] %vm1239, %v1188
        %1731 = vst.msk [vmem:[%s503 + $0x68] sm:$0xff] %vm1239, %v1189
        %1732 = vst.msk [vmem:[%s503 + $0x70] sm:$0xff] %vm1239, %v1190
        %1733 = vst.msk [vmem:[%s503 + $0x78] sm:$0xff] %vm1239, %v1191
        %1734 = vst [vmem:[%s509] sm:$0xff] %v970
        %1735 = vst [vmem:[%s509 + $0x8] sm:$0xff] %v973
        %1736 = vst [vmem:[%s509 + $0x10] sm:$0xff] %v978
        %1737 = vst [vmem:[%s509 + $0x18] sm:$0xff] %v981
        %1738 = vst [vmem:[%s509 + $0x20] sm:$0xff] %v986
        %1739 = vst [vmem:[%s509 + $0x28] sm:$0xff] %v989
        %1740 = vst [vmem:[%s509 + $0x30] sm:$0xff] %v994
        %1741 = vst [vmem:[%s509 + $0x38] sm:$0xff] %v997
        %1742 = vst [vmem:[%s509 + $0x40] sm:$0xff] %v1002
        %1743 = vst [vmem:[%s509 + $0x48] sm:$0xff] %v1005
        %1744 = vst [vmem:[%s509 + $0x50] sm:$0xff] %v1010
        %1745 = vst [vmem:[%s509 + $0x58] sm:$0xff] %v1013
        %1746 = vst [vmem:[%s509 + $0x60] sm:$0xff] %v1018
        %1747 = vst [vmem:[%s509 + $0x68] sm:$0xff] %v1021
        %1748 = vst [vmem:[%s509 + $0x70] sm:$0xff] %v1026
        %1749 = vst [vmem:[%s509 + $0x78] sm:$0xff] %v1029
        %s1750 = sand.u32 %s257, 1
        %s1751 = scalar_lea.sflag [#allocation4], %s1750
        %s1752 = sand.u32 %s257, 1
        %s1753 = smul.addr %s1752, 128
        %s1754 = scalar_lea.vmem [#allocation8], %s1753
        %s1755 = smul.u32 16, %s29
        %p1756 = scmp.lt.s32.totalorder %s1755, 31
        %s1757 = scalar_select %p1756, %s1755, 31
        %s1758 = smul.addr %s1757, 8
        %s1759 = scalar_lea.vmem %s11, %s1758
        %s1760 = smul.u32 16, %s29
        %p1761 = scmp.lt.s32.totalorder %s1760, 31
        %s1762 = scalar_select %p1761, %s1760, 31
        %s1763 = smul.addr %s1762, 8
        %s1764 = scalar_lea.vmem %s12, %s1763
        // Predicated region
        $region73: #{vae_forward.1} parent=59 // pred_check
          %p1765 = pneg %p267
        $region74: #{vae_forward.1} parent=59 // pred_check_branch
          %1767 = sbr.rel (%p1765) target = $region76
        $region75: #{vae_forward.1} parent=59 // pred_region
          %s1768 = smul.u32 16, %s29
          %s1770 = ssub.s32 2048, 2048
          %1771 = vsyncadd %s1751, %s1770
          %s1772 = smul.addr %s1768, 2
          %s1773 = smul.addr %s1772, 64
          %s1774 = scalar_lea.hbm %s10, %s1773
          %s1775 = sshll.u32 %s1754, 4
          %s1776 = int_to_ptr.vmem [resolvable:$true] %s1775
          %1781 = dma.vmem_to_hbm [thread:$0]  %s1776, 2048, %s1774, %s1751, 128, 128, 8
        $region76: #{vae_forward.1} parent=59 // pred_fallthru
          _
        // Predicated region
        $region77: #{vae_forward.1} parent=59 // pred_check
          %p1782 = pneg %p293
        $region78: #{vae_forward.1} parent=59 // pred_check_branch
          %1784 = sbr.rel (%p1782) target = $region80
        $region79: #{vae_forward.1} parent=59 // pred_region
          %s1785 = smul.u32 16, %s29
        $region80: #{vae_forward.1} parent=59 // pred_fallthru
          _
        // Predicated region
        $region81: #{vae_forward.1} parent=59 // pred_check
          %p1786 = pneg %p319
        $region82: #{vae_forward.1} parent=59 // pred_check_branch
          %1788 = sbr.rel (%p1786) target = $region84
        $region83: #{vae_forward.1} parent=59 // pred_region
          %s1789 = smul.u32 16, %s29
        $region84: #{vae_forward.1} parent=59 // pred_fallthru
          _
      $region60: #{vae_forward.1} parent=5 // pred_fallthru
        _
      %p1790 = scmp.le.s32.totalorder 2, %s24
      // Predicated region
      $region85: #{vae_forward.1} parent=5 // pred_check
        %p1791 = pneg %p1790
      $region86: #{vae_forward.1} parent=5 // pred_check_branch
        %1793 = sbr.rel (%p1791) target = $region88
      $region87: #{vae_forward.1} parent=5 // pred_region
        %s1794 = ssub.s32 %s24, 2
        // Predicated region
        $region89: #{vae_forward.1} parent=87 // pred_check
          %p1795 = pneg %p273
        $region90: #{vae_forward.1} parent=87 // pred_check_branch
          %1797 = sbr.rel (%p1795) target = $region92
        $region91: #{vae_forward.1} parent=87 // pred_region
          %s1798 = sand.u32 %s258, 1
          %s1799 = scalar_lea.sflag [#allocation4], %s1798
          %s1800 = sand.u32 %s258, 1
          %s1801 = smul.addr %s1800, 128
          %s1802 = scalar_lea.vmem [#allocation8], %s1801
          %1803 = dma.done %s1799, 2048
        $region92: #{vae_forward.1} parent=87 // pred_fallthru
          _
        // Predicated region
        $region93: #{vae_forward.1} parent=87 // pred_check
          %p1804 = pneg %p299
        $region94: #{vae_forward.1} parent=87 // pred_check_branch
          %1806 = sbr.rel (%p1804) target = $region96
        $region95: #{vae_forward.1} parent=87 // pred_region
          %s1807 = smul.u32 16, %s30
          %p1808 = scmp.lt.s32.totalorder %s1807, 31
          %s1809 = scalar_select %p1808, %s1807, 31
          %s1810 = smul.addr %s1809, 8
          %s1811 = scalar_lea.vmem %s11, %s1810
        $region96: #{vae_forward.1} parent=87 // pred_fallthru
          _
        // Predicated region
        $region97: #{vae_forward.1} parent=87 // pred_check
          %p1812 = pneg %p325
        $region98: #{vae_forward.1} parent=87 // pred_check_branch
          %1814 = sbr.rel (%p1812) target = $region100
        $region99: #{vae_forward.1} parent=87 // pred_region
          %s1815 = smul.u32 16, %s30
          %p1816 = scmp.lt.s32.totalorder %s1815, 31
          %s1817 = scalar_select %p1816, %s1815, 31
          %s1818 = smul.addr %s1817, 8
          %s1819 = scalar_lea.vmem %s12, %s1818
        $region100: #{vae_forward.1} parent=87 // pred_fallthru
          _
      $region88: #{vae_forward.1} parent=5 // pred_fallthru
        _
    $region6: #{vae_forward.1} parent=1 // loop_footer
      %s28 = sadd.s32 1, %s24
    $region7: #{vae_forward.1} parent=1 // loop_footer_branch
      %23 = sbr.rel target = $region3
    $region8: #{vae_forward.1} parent=1 // loop_exit
      _
    %1820 = vsyncpa [#allocation3], 1
    %s1821 = scalar_lea.sflag [#allocation3], 1
    %1822 = vsyncpa %s1821, 1
    %1823 = vsyncpa [#allocation6], 1
    %1824 = vsyncpa [#allocation4], 1
    %s1825 = scalar_lea.sflag [#allocation4], 1
    %1826 = vsyncpa %s1825, 1

</llo_original>
